<compile_context>
chip_gen: v7x
topology: tpu7x:2x2x1
jax: 0.10.0
libtpu: 0.0.40
codegen_flags: <defaults>
</compile_context>

<pallas_src>
import functools
import math

import jax
import jax.numpy as jnp
from jax import lax
from jax.experimental import pallas as pl
from jax.experimental.pallas import tpu as pltpu


def _unet_conv_block_kernel(x_ref, w1_ref, b1_ref, w2_ref, b2_ref, mask_ref,
                            seg_ref, eca_w_ref, alpha_ref, o_ref,
                            p1_ref, p2_ref, *, H, W, Nb, k, pad):
    """One grid step = Nb images, channels on sublanes / (image, spatial) on lanes.

    x_ref:     (1, Cin, L)      L = Nb*H*W flattened input tile (VMEM)
    w1_ref:    (Cout, 9*Cin)    conv1 weights, columns ordered tap-major then Cin
    b1_ref:    (Cout, 1)
    w2_ref:    (Cout, 9*Cout)   conv2 weights
    b2_ref:    (Cout, 1)
    mask_ref:  (8, L)           precomputed 0/1 border masks (8 non-center taps)
    seg_ref:   (Nb, L)          0/1 per-image lane selectors
    eca_w_ref: (k,) SMEM        ECA 1-D conv weights
    alpha_ref: (2,) SMEM        PReLU slopes (a1, a2)
    o_ref:     (1, Cout, L)     lane-dense output tile
    p1_ref:    (9*Cin, L)       VMEM scratch: stacked patches for conv1
    p2_ref:    (9*Cout, L)      VMEM scratch: stacked patches for conv2
    """
    _, Cout, L = o_ref.shape
    Cin = x_ref.shape[1]
    HW = H * W
    a1 = alpha_ref[0]
    a2 = alpha_ref[1]

    masks = mask_ref[...]   # (8, L)
    segs = seg_ref[...]     # (Nb, L)

    def build_patches(xin, c, p_ref):
        # Stack the 9 shifted & border-masked taps along sublanes -> (9*c, L).
        mi = 0
        for tap in range(9):
            dy = tap // 3 - 1
            dx = tap % 3 - 1
            d = dy * W + dx
            if d == 0:
                patch = xin
            else:
                rolled = pltpu.roll(xin, shift=(-d) % L, axis=1)  # XLU lane rotate
                patch = rolled * masks[mi][None, :]               # zero the halo
                mi += 1
            p_ref[pl.ds(tap * c, c), :] = patch.astype(p_ref.dtype)
        return p_ref[...]

    # ---- Conv1 (single stacked-K matmul) + PReLU ----
    x = x_ref[0].astype(jnp.float32)
    pat1 = build_patches(x, Cin, p1_ref)
    h1 = jnp.dot(w1_ref[...], pat1, preferred_element_type=jnp.float32) + b1_ref[...]
    h1 = jnp.where(h1 >= 0, h1, a1 * h1)

    # ---- Conv2 (single stacked-K matmul) + PReLU ----
    pat2 = build_patches(h1, Cout, p2_ref)
    h2 = jnp.dot(w2_ref[...], pat2, preferred_element_type=jnp.float32) + b2_ref[...]
    h2 = jnp.where(h2 >= 0, h2, a2 * h2)

    # ---- ECA per image: masked GAP -> 1-D channel conv (sublane rolls) -> sigmoid ----
    cidx = lax.broadcasted_iota(jnp.int32, (Cout, 1), 0)
    inv_hw = jnp.float32(1.0 / HW)
    scale = None
    for b in range(Nb):
        seg = segs[b][None, :]                                     # (1, L) 0/1
        gap = jnp.sum(h2 * seg, axis=1, keepdims=True) * inv_hw    # (Cout, 1)
        attn = jnp.zeros((Cout, 1), jnp.float32)
        for t in range(k):
            s = t - pad
            if s == 0:
                term = gap
            else:
                rolled = pltpu.roll(gap, shift=(-s) % Cout, axis=0)
                valid = jnp.logical_and(cidx + s >= 0, cidx + s < Cout)
                term = jnp.where(valid, rolled, 0.0)
            attn = attn + eca_w_ref[t] * term
        attn = jax.nn.sigmoid(attn)                                # (Cout, 1)
        contrib = attn * seg                                       # (Cout, L)
        scale = contrib if scale is None else scale + contrib

    # Lane-dense store: last dim L is a multiple of 128 for the shapes used here.
    o_ref[...] = (h2 * scale).reshape(1, Cout, L).astype(o_ref.dtype)


def eca_kernel_size(channels, b=1, gamma=2):
    # Matches the module's ECA.adaptive_kernel() exactly (not the canonical
    # ECA-Net formula): int(abs(log2(C)/gamma) + b), rounded up to odd.
    kk = int(abs(math.log2(channels) / gamma) + b)
    return kk if kk % 2 else kk + 1


def _pick_batch_tile(N, HW, min_lanes=512, max_lanes=4096):
    """Images folded into the lane axis per grid step.

    Prefer lane width >= min_lanes (amortize ~0.35 us per-grid-step overhead, fill
    the 256-wide MXU), but keep >= 2 grid steps when possible so both v7x
    TensorCores get work ("parallel" grid axis)."""
    best = 1
    for d in range(1, N + 1):
        if N % d or d * HW > max_lanes:
            continue
        if N // d >= 2 or N == 1:
            best = d
            if d * HW >= min_lanes:
                break
    return best


def unet_conv_block(x_nchw, w1, b1, w2, b2, w_eca, a1, a2, *,
                    matmul_dtype=jnp.float32, out_dtype=jnp.float32):
    """Fused UNetConvBlock (ca_layer=True).  x_nchw: (N, Cin, H, W) -> (N, Cout, H, W)."""
    N, Cin, H, W = x_nchw.shape
    Cout = w1.shape[0]
    HW = H * W

    Nb = _pick_batch_tile(N, HW)
    G = N // Nb
    L = Nb * HW

    # Flattened NCHW with Nb images folded into the lane axis.  For Nb == 1 this is a
    # pure (free) reshape; for Nb > 1 the single relayout is amortized by G x fewer
    # grid steps and fatter matmuls.
    x = x_nchw.reshape(N, Cin, HW).astype(jnp.float32)
    x = x.reshape(G, Nb, Cin, HW).transpose(0, 2, 1, 3).reshape(G, Cin, L)

    # (Cout, Cin, 3, 3) -> (Cout, 9*Cin): column index = (ky*3+kx)*Cin + ci, matching
    # the tap-major sublane stacking of the in-kernel patch scratch.
    w1r = jnp.transpose(w1, (0, 2, 3, 1)).reshape(Cout, 9 * Cin).astype(matmul_dtype)
    w2r = jnp.transpose(w2, (0, 2, 3, 1)).reshape(Cout, 9 * Cout).astype(matmul_dtype)
    b1r = b1.reshape(Cout, 1).astype(jnp.float32)
    b2r = b2.reshape(Cout, 1).astype(jnp.float32)

    # Precomputed 0/1 border masks for the 8 non-center taps, tiled per image: kills
    # both zero-padding halo taps and roll wrap-around (incl. cross-image leakage).
    pos = jnp.arange(HW, dtype=jnp.int32)
    yy = pos // W
    xx = pos % W
    rows = []
    for tap in range(9):
        dy = tap // 3 - 1
        dx = tap % 3 - 1
        if dy == 0 and dx == 0:
            continue
        m = jnp.ones((HW,), dtype=bool)
        if dy > 0:
            m = m & (yy < H - dy)
        if dy < 0:
            m = m & (yy >= -dy)
        if dx > 0:
            m = m & (xx < W - dx)
        if dx < 0:
            m = m & (xx >= -dx)
        rows.append(m)
    masks = jnp.tile(jnp.stack(rows, axis=0).astype(jnp.float32), (1, Nb))   # (8, L)

    # Per-image lane selectors for ECA's per-image global average pool / rescale.
    img = jnp.arange(L, dtype=jnp.int32) // HW
    segs = (img[None, :] == jnp.arange(Nb, dtype=jnp.int32)[:, None]).astype(jnp.float32)

    k = w_eca.shape[-1]
    pad = (k - 1) // 2
    eca_w = w_eca.reshape(k).astype(jnp.float32)
    alphas = jnp.stack([jnp.asarray(a1, jnp.float32), jnp.asarray(a2, jnp.float32)])

    kernel = functools.partial(_unet_conv_block_kernel, H=H, W=W, Nb=Nb, k=k, pad=pad)

    grid_spec = pltpu.PrefetchScalarGridSpec(
        num_scalar_prefetch=0,
        grid=(G,),
        in_specs=[
            pl.BlockSpec((1, Cin, L), lambda g: (g, 0, 0)),
            pl.BlockSpec((Cout, 9 * Cin), lambda g: (0, 0)),
            pl.BlockSpec((Cout, 1), lambda g: (0, 0)),
            pl.BlockSpec((Cout, 9 * Cout), lambda g: (0, 0)),
            pl.BlockSpec((Cout, 1), lambda g: (0, 0)),
            pl.BlockSpec((8, L), lambda g: (0, 0)),
            pl.BlockSpec((Nb, L), lambda g: (0, 0)),
            pl.BlockSpec(memory_space=pltpu.MemorySpace.SMEM),  # ECA weights (k,)
            pl.BlockSpec(memory_space=pltpu.MemorySpace.SMEM),  # PReLU slopes (2,)
        ],
        out_specs=pl.BlockSpec((1, Cout, L), lambda g: (g, 0, 0)),
        scratch_shapes=[pltpu.VMEM((9 * Cin, L), matmul_dtype),
                        pltpu.VMEM((9 * Cout, L), matmul_dtype)],
    )

    out = pl.pallas_call(
        kernel,
        out_shape=jax.ShapeDtypeStruct((G, Cout, L), out_dtype),
        grid_spec=grid_spec,
        compiler_params=pltpu.CompilerParams(dimension_semantics=("parallel",)),
    )(x, w1r, b1r, w2r, b2r, masks, segs, eca_w, alphas)

    # Unfold lanes back to (N, Cout, H, W) (free reshape when Nb == 1).
    return out.reshape(G, Cout, Nb, HW).transpose(0, 2, 1, 3).reshape(N, Cout, H, W)


def reference_unet_conv_block(x_nchw, w1, b1, w2, b2, w_eca, a1, a2):
    """Pure-JAX reference mirroring the PyTorch forward."""
    def conv2d(x, w, b):
        y = lax.conv_general_dilated(
            x.astype(jnp.float32), w.astype(jnp.float32), (1, 1),
            ((1, 1), (1, 1)), dimension_numbers=("NCHW", "OIHW", "NCHW"))
        return y + b.astype(jnp.float32)[None, :, None, None]

    def prelu(x, a):
        return jnp.where(x >= 0, x, a * x)

    h = prelu(conv2d(x_nchw, w1, b1), a1)
    h = prelu(conv2d(h, w2, b2), a2)

    # ECA
    C = h.shape[1]
    k = w_eca.shape[-1]
    pad = (k - 1) // 2
    gap = jnp.mean(h, axis=(2, 3))                       # (N, C)
    gpad = jnp.pad(gap, ((0, 0), (pad, pad)))
    wv = w_eca.reshape(k).astype(jnp.float32)
    attn = jnp.stack(
        [jnp.sum(gpad[:, j:j + k] * wv[None, :], axis=1) for j in range(C)], axis=1)
    attn = jax.nn.sigmoid(attn)
    return h * attn[:, :, None, None]


def _run_case(N, Cin, Cout, H, W, seed):
    key = jax.random.PRNGKey(seed)
    k_x, k_w1, k_b1, k_w2, k_b2, k_eca = jax.random.split(key, 6)

    x = jax.random.normal(k_x, (N, Cin, H, W), jnp.float32)
    w1 = jax.random.normal(k_w1, (Cout, Cin, 3, 3), jnp.float32) * 0.1
    b1 = jax.random.normal(k_b1, (Cout,), jnp.float32) * 0.1
    w2 = jax.random.normal(k_w2, (Cout, Cout, 3, 3), jnp.float32) * 0.1
    b2 = jax.random.normal(k_b2, (Cout,), jnp.float32) * 0.1
    a1 = jnp.float32(0.25)   # nn.PReLU() default single-parameter init
    a2 = jnp.float32(0.25)
    k_size = eca_kernel_size(Cout)
    w_eca = jax.random.normal(k_eca, (1, 1, k_size), jnp.float32) * 0.5

    out = unet_conv_block(x, w1, b1, w2, b2, w_eca, a1, a2)
    out = jax.block_until_ready(out)

    ref = reference_unet_conv_block(x, w1, b1, w2, b2, w_eca, a1, a2)
    assert out.shape == (N, Cout, H, W), out.shape
    err = float(jnp.max(jnp.abs(out - ref)))
    assert jnp.allclose(out, ref, rtol=1e-4, atol=1e-4), err


if __name__ == "__main__":
    # Primary small shape consistent with the module: batch=2, in=4, out=8, 16x16
    # (Nb=1 per step, 2 parallel grid steps).
    _run_case(N=2, Cin=4, Cout=8, H=16, W=16, seed=0)
    # Exercise the batch-folded lane path (Nb=2 images per grid step, 2 grid steps).
    _run_case(N=4, Cin=4, Cout=8, H=16, W=16, seed=1)
    print("KERNEL_OK")
</pallas_src>

<mosaic_0001>
module attributes {stable_mosaic.version = 11 : i64} {
  func.func @_unet_conv_block_kernel(%arg0: i32, %arg1: memref<1x4x256xf32, #tpu.memory_space<vmem>>, %arg2: memref<8x36xf32, #tpu.memory_space<vmem>>, %arg3: memref<8x1xf32, #tpu.memory_space<vmem>>, %arg4: memref<8x72xf32, #tpu.memory_space<vmem>>, %arg5: memref<8x1xf32, #tpu.memory_space<vmem>>, %arg6: memref<8x256xf32, #tpu.memory_space<vmem>>, %arg7: memref<1x256xf32, #tpu.memory_space<vmem>>, %arg8: memref<3xf32, #tpu.memory_space<smem>>, %arg9: memref<2xf32, #tpu.memory_space<smem>>, %arg10: memref<1x8x256xf32, #tpu.memory_space<vmem>>, %arg11: memref<36x256xf32, #tpu.memory_space<vmem>>, %arg12: memref<72x256xf32, #tpu.memory_space<vmem>>) attributes {dimension_semantics = [#tpu.dimension_semantics<parallel>], iteration_bounds = array<i64: 2>, scalar_prefetch = 0 : i64, scratch_operands = 2 : i64, tpu.core_type = #tpu.core_type<tc>, window_params = [{transform_indices = @transform_0, window_bounds = array<i64: 1, 4, 256>}, {pipeline_mode = #tpu.pipeline_mode<synchronous>, transform_indices = @transform_1, window_bounds = array<i64: 8, 36>}, {pipeline_mode = #tpu.pipeline_mode<synchronous>, transform_indices = @transform_2, window_bounds = array<i64: 8, 1>}, {pipeline_mode = #tpu.pipeline_mode<synchronous>, transform_indices = @transform_3, window_bounds = array<i64: 8, 72>}, {pipeline_mode = #tpu.pipeline_mode<synchronous>, transform_indices = @transform_4, window_bounds = array<i64: 8, 1>}, {pipeline_mode = #tpu.pipeline_mode<synchronous>, transform_indices = @transform_5, window_bounds = array<i64: 8, 256>}, {pipeline_mode = #tpu.pipeline_mode<synchronous>, transform_indices = @transform_6, window_bounds = array<i64: 1, 256>}, {transform_indices = @transform_7, window_bounds = array<i64: 3>}, {transform_indices = @transform_8, window_bounds = array<i64: 2>}, {transform_indices = @transform_9, window_bounds = array<i64: 1, 8, 256>}]} {
    %c0 = arith.constant 0 : index
    %0 = memref.load %arg9[%c0] : memref<2xf32, #tpu.memory_space<smem>>
    %c1 = arith.constant 1 : index
    %1 = memref.load %arg9[%c1] : memref<2xf32, #tpu.memory_space<smem>>
    %c0_0 = arith.constant 0 : index
    %c0_1 = arith.constant 0 : index
    %2 = vector.load %arg6[%c0_0, %c0_1] : memref<8x256xf32, #tpu.memory_space<vmem>>, vector<8x256xf32>
    %c0_2 = arith.constant 0 : index
    %c0_3 = arith.constant 0 : index
    %3 = vector.load %arg7[%c0_2, %c0_3] : memref<1x256xf32, #tpu.memory_space<vmem>>, vector<1x256xf32>
    %c0_4 = arith.constant 0 : index
    %c0_5 = arith.constant 0 : index
    %c0_6 = arith.constant 0 : index
    %4 = vector.load %arg1[%c0_4, %c0_5, %c0_6] : memref<1x4x256xf32, #tpu.memory_space<vmem>>, vector<1x4x256xf32>
    %5 = vector.shape_cast %4 : vector<1x4x256xf32> to vector<4x256xf32>
    %c17_i32 = arith.constant 17 : i32
    %6 = tpu.dynamic_rotate %5 by %c17_i32 dim 1 : vector<4x256xf32>, i32 -> vector<4x256xf32>
    %7 = vector.extract_strided_slice %2 {offsets = [0, 0], sizes = [1, 256], strides = [1, 1]} : vector<8x256xf32> to vector<1x256xf32>
    %8 = vector.shape_cast %7 : vector<1x256xf32> to vector<256xf32>
    %9 = vector.shape_cast %8 : vector<256xf32> to vector<1x256xf32>
    %10 = vector.broadcast %9 : vector<1x256xf32> to vector<4x256xf32>
    %11 = arith.mulf %6, %10 : vector<4x256xf32>
    %c0_7 = arith.constant 0 : index
    %c0_8 = arith.constant 0 : index
    %12 = vector.load %arg11[%c0_7, %c0_8] : memref<36x256xf32, #tpu.memory_space<vmem>>, vector<4x256xf32>
    tpu.vector_store %arg11[%c0_7, %c0_8], %11 {strides = array<i32>} : memref<36x256xf32, #tpu.memory_space<vmem>>, vector<4x256xf32>,
    %c16_i32 = arith.constant 16 : i32
    %13 = tpu.dynamic_rotate %5 by %c16_i32 dim 1 : vector<4x256xf32>, i32 -> vector<4x256xf32>
    %14 = vector.extract_strided_slice %2 {offsets = [1, 0], sizes = [1, 256], strides = [1, 1]} : vector<8x256xf32> to vector<1x256xf32>
    %15 = vector.shape_cast %14 : vector<1x256xf32> to vector<256xf32>
    %16 = vector.shape_cast %15 : vector<256xf32> to vector<1x256xf32>
    %17 = vector.broadcast %16 : vector<1x256xf32> to vector<4x256xf32>
    %18 = arith.mulf %13, %17 : vector<4x256xf32>
    %c4 = arith.constant 4 : index
    %c0_9 = arith.constant 0 : index
    %19 = vector.load %arg11[%c4, %c0_9] : memref<36x256xf32, #tpu.memory_space<vmem>>, vector<4x256xf32>
    tpu.vector_store %arg11[%c4, %c0_9], %18 {strides = array<i32>} : memref<36x256xf32, #tpu.memory_space<vmem>>, vector<4x256xf32>,
    %c15_i32 = arith.constant 15 : i32
    %20 = tpu.dynamic_rotate %5 by %c15_i32 dim 1 : vector<4x256xf32>, i32 -> vector<4x256xf32>
    %21 = vector.extract_strided_slice %2 {offsets = [2, 0], sizes = [1, 256], strides = [1, 1]} : vector<8x256xf32> to vector<1x256xf32>
    %22 = vector.shape_cast %21 : vector<1x256xf32> to vector<256xf32>
    %23 = vector.shape_cast %22 : vector<256xf32> to vector<1x256xf32>
    %24 = vector.broadcast %23 : vector<1x256xf32> to vector<4x256xf32>
    %25 = arith.mulf %20, %24 : vector<4x256xf32>
    %c8 = arith.constant 8 : index
    %c0_10 = arith.constant 0 : index
    %26 = vector.load %arg11[%c8, %c0_10] : memref<36x256xf32, #tpu.memory_space<vmem>>, vector<4x256xf32>
    tpu.vector_store %arg11[%c8, %c0_10], %25 {strides = array<i32>} : memref<36x256xf32, #tpu.memory_space<vmem>>, vector<4x256xf32>,
    %c1_i32 = arith.constant 1 : i32
    %27 = tpu.dynamic_rotate %5 by %c1_i32 dim 1 : vector<4x256xf32>, i32 -> vector<4x256xf32>
    %28 = vector.extract_strided_slice %2 {offsets = [3, 0], sizes = [1, 256], strides = [1, 1]} : vector<8x256xf32> to vector<1x256xf32>
    %29 = vector.shape_cast %28 : vector<1x256xf32> to vector<256xf32>
    %30 = vector.shape_cast %29 : vector<256xf32> to vector<1x256xf32>
    %31 = vector.broadcast %30 : vector<1x256xf32> to vector<4x256xf32>
    %32 = arith.mulf %27, %31 : vector<4x256xf32>
    %c12 = arith.constant 12 : index
    %c0_11 = arith.constant 0 : index
    %33 = vector.load %arg11[%c12, %c0_11] : memref<36x256xf32, #tpu.memory_space<vmem>>, vector<4x256xf32>
    tpu.vector_store %arg11[%c12, %c0_11], %32 {strides = array<i32>} : memref<36x256xf32, #tpu.memory_space<vmem>>, vector<4x256xf32>,
    %c16 = arith.constant 16 : index
    %c0_12 = arith.constant 0 : index
    %34 = vector.load %arg11[%c16, %c0_12] : memref<36x256xf32, #tpu.memory_space<vmem>>, vector<4x256xf32>
    tpu.vector_store %arg11[%c16, %c0_12], %5 {strides = array<i32>} : memref<36x256xf32, #tpu.memory_space<vmem>>, vector<4x256xf32>,
    %c255_i32 = arith.constant 255 : i32
    %35 = tpu.dynamic_rotate %5 by %c255_i32 dim 1 : vector<4x256xf32>, i32 -> vector<4x256xf32>
    %36 = vector.extract_strided_slice %2 {offsets = [4, 0], sizes = [1, 256], strides = [1, 1]} : vector<8x256xf32> to vector<1x256xf32>
    %37 = vector.shape_cast %36 : vector<1x256xf32> to vector<256xf32>
    %38 = vector.shape_cast %37 : vector<256xf32> to vector<1x256xf32>
    %39 = vector.broadcast %38 : vector<1x256xf32> to vector<4x256xf32>
    %40 = arith.mulf %35, %39 : vector<4x256xf32>
    %c20 = arith.constant 20 : index
    %c0_13 = arith.constant 0 : index
    %41 = vector.load %arg11[%c20, %c0_13] : memref<36x256xf32, #tpu.memory_space<vmem>>, vector<4x256xf32>
    tpu.vector_store %arg11[%c20, %c0_13], %40 {strides = array<i32>} : memref<36x256xf32, #tpu.memory_space<vmem>>, vector<4x256xf32>,
    %c241_i32 = arith.constant 241 : i32
    %42 = tpu.dynamic_rotate %5 by %c241_i32 dim 1 : vector<4x256xf32>, i32 -> vector<4x256xf32>
    %43 = vector.extract_strided_slice %2 {offsets = [5, 0], sizes = [1, 256], strides = [1, 1]} : vector<8x256xf32> to vector<1x256xf32>
    %44 = vector.shape_cast %43 : vector<1x256xf32> to vector<256xf32>
    %45 = vector.shape_cast %44 : vector<256xf32> to vector<1x256xf32>
    %46 = vector.broadcast %45 : vector<1x256xf32> to vector<4x256xf32>
    %47 = arith.mulf %42, %46 : vector<4x256xf32>
    %c24 = arith.constant 24 : index
    %c0_14 = arith.constant 0 : index
    %48 = vector.load %arg11[%c24, %c0_14] : memref<36x256xf32, #tpu.memory_space<vmem>>, vector<4x256xf32>
    tpu.vector_store %arg11[%c24, %c0_14], %47 {strides = array<i32>} : memref<36x256xf32, #tpu.memory_space<vmem>>, vector<4x256xf32>,
    %c240_i32 = arith.constant 240 : i32
    %49 = tpu.dynamic_rotate %5 by %c240_i32 dim 1 : vector<4x256xf32>, i32 -> vector<4x256xf32>
    %50 = vector.extract_strided_slice %2 {offsets = [6, 0], sizes = [1, 256], strides = [1, 1]} : vector<8x256xf32> to vector<1x256xf32>
    %51 = vector.shape_cast %50 : vector<1x256xf32> to vector<256xf32>
    %52 = vector.shape_cast %51 : vector<256xf32> to vector<1x256xf32>
    %53 = vector.broadcast %52 : vector<1x256xf32> to vector<4x256xf32>
    %54 = arith.mulf %49, %53 : vector<4x256xf32>
    %c28 = arith.constant 28 : index
    %c0_15 = arith.constant 0 : index
    %55 = vector.load %arg11[%c28, %c0_15] : memref<36x256xf32, #tpu.memory_space<vmem>>, vector<4x256xf32>
    tpu.vector_store %arg11[%c28, %c0_15], %54 {strides = array<i32>} : memref<36x256xf32, #tpu.memory_space<vmem>>, vector<4x256xf32>,
    %c239_i32 = arith.constant 239 : i32
    %56 = tpu.dynamic_rotate %5 by %c239_i32 dim 1 : vector<4x256xf32>, i32 -> vector<4x256xf32>
    %57 = vector.extract_strided_slice %2 {offsets = [7, 0], sizes = [1, 256], strides = [1, 1]} : vector<8x256xf32> to vector<1x256xf32>
    %58 = vector.shape_cast %57 : vector<1x256xf32> to vector<256xf32>
    %59 = vector.shape_cast %58 : vector<256xf32> to vector<1x256xf32>
    %60 = vector.broadcast %59 : vector<1x256xf32> to vector<4x256xf32>
    %61 = arith.mulf %56, %60 : vector<4x256xf32>
    %c32 = arith.constant 32 : index
    %c0_16 = arith.constant 0 : index
    %62 = vector.load %arg11[%c32, %c0_16] : memref<36x256xf32, #tpu.memory_space<vmem>>, vector<4x256xf32>
    tpu.vector_store %arg11[%c32, %c0_16], %61 {strides = array<i32>} : memref<36x256xf32, #tpu.memory_space<vmem>>, vector<4x256xf32>,
    %c0_17 = arith.constant 0 : index
    %c0_18 = arith.constant 0 : index
    %63 = vector.load %arg11[%c0_17, %c0_18] : memref<36x256xf32, #tpu.memory_space<vmem>>, vector<36x256xf32>
    %c0_19 = arith.constant 0 : index
    %c0_20 = arith.constant 0 : index
    %64 = vector.load %arg2[%c0_19, %c0_20] : memref<8x36xf32, #tpu.memory_space<vmem>>, vector<8x36xf32>
    %cst = arith.constant dense<0.000000e+00> : vector<8x256xf32>
    %65 = tpu.matmul %64, %63, %cst {dimension_numbers = #tpu.dot_dimension_numbers<[1], [0], [0], [1], [0, 0, 1, 1], [], []>} : vector<8x36xf32>, vector<36x256xf32>, vector<8x256xf32> -> vector<8x256xf32>
    %c0_21 = arith.constant 0 : index
    %c0_22 = arith.constant 0 : index
    %66 = vector.load %arg3[%c0_21, %c0_22] : memref<8x1xf32, #tpu.memory_space<vmem>>, vector<8x1xf32>
    %67 = vector.broadcast %66 : vector<8x1xf32> to vector<8x256xf32>
    %68 = arith.addf %65, %67 : vector<8x256xf32>
    %cst_23 = arith.constant 0.000000e+00 : f32
    %69 = vector.broadcast %cst_23 : f32 to vector<8x256xf32>
    %70 = arith.cmpf oge, %68, %69 : vector<8x256xf32>
    %71 = vector.broadcast %0 : f32 to vector<8x256xf32>
    %72 = arith.mulf %71, %68 : vector<8x256xf32>
    %73 = arith.select %70, %68, %72 : vector<8x256xi1>, vector<8x256xf32>
    %c17_i32_24 = arith.constant 17 : i32
    %74 = tpu.dynamic_rotate %73 by %c17_i32_24 dim 1 : vector<8x256xf32>, i32 -> vector<8x256xf32>
    %75 = vector.extract_strided_slice %2 {offsets = [0, 0], sizes = [1, 256], strides = [1, 1]} : vector<8x256xf32> to vector<1x256xf32>
    %76 = vector.shape_cast %75 : vector<1x256xf32> to vector<256xf32>
    %77 = vector.shape_cast %76 : vector<256xf32> to vector<1x256xf32>
    %78 = vector.broadcast %77 : vector<1x256xf32> to vector<8x256xf32>
    %79 = arith.mulf %74, %78 : vector<8x256xf32>
    %c0_25 = arith.constant 0 : index
    %c0_26 = arith.constant 0 : index
    %80 = vector.load %arg12[%c0_25, %c0_26] : memref<72x256xf32, #tpu.memory_space<vmem>>, vector<8x256xf32>
    tpu.vector_store %arg12[%c0_25, %c0_26], %79 {strides = array<i32>} : memref<72x256xf32, #tpu.memory_space<vmem>>, vector<8x256xf32>,
    %c16_i32_27 = arith.constant 16 : i32
    %81 = tpu.dynamic_rotate %73 by %c16_i32_27 dim 1 : vector<8x256xf32>, i32 -> vector<8x256xf32>
    %82 = vector.extract_strided_slice %2 {offsets = [1, 0], sizes = [1, 256], strides = [1, 1]} : vector<8x256xf32> to vector<1x256xf32>
    %83 = vector.shape_cast %82 : vector<1x256xf32> to vector<256xf32>
    %84 = vector.shape_cast %83 : vector<256xf32> to vector<1x256xf32>
    %85 = vector.broadcast %84 : vector<1x256xf32> to vector<8x256xf32>
    %86 = arith.mulf %81, %85 : vector<8x256xf32>
    %c8_28 = arith.constant 8 : index
    %c0_29 = arith.constant 0 : index
    %87 = vector.load %arg12[%c8_28, %c0_29] : memref<72x256xf32, #tpu.memory_space<vmem>>, vector<8x256xf32>
    tpu.vector_store %arg12[%c8_28, %c0_29], %86 {strides = array<i32>} : memref<72x256xf32, #tpu.memory_space<vmem>>, vector<8x256xf32>,
    %c15_i32_30 = arith.constant 15 : i32
    %88 = tpu.dynamic_rotate %73 by %c15_i32_30 dim 1 : vector<8x256xf32>, i32 -> vector<8x256xf32>
    %89 = vector.extract_strided_slice %2 {offsets = [2, 0], sizes = [1, 256], strides = [1, 1]} : vector<8x256xf32> to vector<1x256xf32>
    %90 = vector.shape_cast %89 : vector<1x256xf32> to vector<256xf32>
    %91 = vector.shape_cast %90 : vector<256xf32> to vector<1x256xf32>
    %92 = vector.broadcast %91 : vector<1x256xf32> to vector<8x256xf32>
    %93 = arith.mulf %88, %92 : vector<8x256xf32>
    %c16_31 = arith.constant 16 : index
    %c0_32 = arith.constant 0 : index
    %94 = vector.load %arg12[%c16_31, %c0_32] : memref<72x256xf32, #tpu.memory_space<vmem>>, vector<8x256xf32>
    tpu.vector_store %arg12[%c16_31, %c0_32], %93 {strides = array<i32>} : memref<72x256xf32, #tpu.memory_space<vmem>>, vector<8x256xf32>,
    %c1_i32_33 = arith.constant 1 : i32
    %95 = tpu.dynamic_rotate %73 by %c1_i32_33 dim 1 : vector<8x256xf32>, i32 -> vector<8x256xf32>
    %96 = vector.extract_strided_slice %2 {offsets = [3, 0], sizes = [1, 256], strides = [1, 1]} : vector<8x256xf32> to vector<1x256xf32>
    %97 = vector.shape_cast %96 : vector<1x256xf32> to vector<256xf32>
    %98 = vector.shape_cast %97 : vector<256xf32> to vector<1x256xf32>
    %99 = vector.broadcast %98 : vector<1x256xf32> to vector<8x256xf32>
    %100 = arith.mulf %95, %99 : vector<8x256xf32>
    %c24_34 = arith.constant 24 : index
    %c0_35 = arith.constant 0 : index
    %101 = vector.load %arg12[%c24_34, %c0_35] : memref<72x256xf32, #tpu.memory_space<vmem>>, vector<8x256xf32>
    tpu.vector_store %arg12[%c24_34, %c0_35], %100 {strides = array<i32>} : memref<72x256xf32, #tpu.memory_space<vmem>>, vector<8x256xf32>,
    %c32_36 = arith.constant 32 : index
    %c0_37 = arith.constant 0 : index
    %102 = vector.load %arg12[%c32_36, %c0_37] : memref<72x256xf32, #tpu.memory_space<vmem>>, vector<8x256xf32>
    tpu.vector_store %arg12[%c32_36, %c0_37], %73 {strides = array<i32>} : memref<72x256xf32, #tpu.memory_space<vmem>>, vector<8x256xf32>,
    %c255_i32_38 = arith.constant 255 : i32
    %103 = tpu.dynamic_rotate %73 by %c255_i32_38 dim 1 : vector<8x256xf32>, i32 -> vector<8x256xf32>
    %104 = vector.extract_strided_slice %2 {offsets = [4, 0], sizes = [1, 256], strides = [1, 1]} : vector<8x256xf32> to vector<1x256xf32>
    %105 = vector.shape_cast %104 : vector<1x256xf32> to vector<256xf32>
    %106 = vector.shape_cast %105 : vector<256xf32> to vector<1x256xf32>
    %107 = vector.broadcast %106 : vector<1x256xf32> to vector<8x256xf32>
    %108 = arith.mulf %103, %107 : vector<8x256xf32>
    %c40 = arith.constant 40 : index
    %c0_39 = arith.constant 0 : index
    %109 = vector.load %arg12[%c40, %c0_39] : memref<72x256xf32, #tpu.memory_space<vmem>>, vector<8x256xf32>
    tpu.vector_store %arg12[%c40, %c0_39], %108 {strides = array<i32>} : memref<72x256xf32, #tpu.memory_space<vmem>>, vector<8x256xf32>,
    %c241_i32_40 = arith.constant 241 : i32
    %110 = tpu.dynamic_rotate %73 by %c241_i32_40 dim 1 : vector<8x256xf32>, i32 -> vector<8x256xf32>
    %111 = vector.extract_strided_slice %2 {offsets = [5, 0], sizes = [1, 256], strides = [1, 1]} : vector<8x256xf32> to vector<1x256xf32>
    %112 = vector.shape_cast %111 : vector<1x256xf32> to vector<256xf32>
    %113 = vector.shape_cast %112 : vector<256xf32> to vector<1x256xf32>
    %114 = vector.broadcast %113 : vector<1x256xf32> to vector<8x256xf32>
    %115 = arith.mulf %110, %114 : vector<8x256xf32>
    %c48 = arith.constant 48 : index
    %c0_41 = arith.constant 0 : index
    %116 = vector.load %arg12[%c48, %c0_41] : memref<72x256xf32, #tpu.memory_space<vmem>>, vector<8x256xf32>
    tpu.vector_store %arg12[%c48, %c0_41], %115 {strides = array<i32>} : memref<72x256xf32, #tpu.memory_space<vmem>>, vector<8x256xf32>,
    %c240_i32_42 = arith.constant 240 : i32
    %117 = tpu.dynamic_rotate %73 by %c240_i32_42 dim 1 : vector<8x256xf32>, i32 -> vector<8x256xf32>
    %118 = vector.extract_strided_slice %2 {offsets = [6, 0], sizes = [1, 256], strides = [1, 1]} : vector<8x256xf32> to vector<1x256xf32>
    %119 = vector.shape_cast %118 : vector<1x256xf32> to vector<256xf32>
    %120 = vector.shape_cast %119 : vector<256xf32> to vector<1x256xf32>
    %121 = vector.broadcast %120 : vector<1x256xf32> to vector<8x256xf32>
    %122 = arith.mulf %117, %121 : vector<8x256xf32>
    %c56 = arith.constant 56 : index
    %c0_43 = arith.constant 0 : index
    %123 = vector.load %arg12[%c56, %c0_43] : memref<72x256xf32, #tpu.memory_space<vmem>>, vector<8x256xf32>
    tpu.vector_store %arg12[%c56, %c0_43], %122 {strides = array<i32>} : memref<72x256xf32, #tpu.memory_space<vmem>>, vector<8x256xf32>,
    %c239_i32_44 = arith.constant 239 : i32
    %124 = tpu.dynamic_rotate %73 by %c239_i32_44 dim 1 : vector<8x256xf32>, i32 -> vector<8x256xf32>
    %125 = vector.extract_strided_slice %2 {offsets = [7, 0], sizes = [1, 256], strides = [1, 1]} : vector<8x256xf32> to vector<1x256xf32>
    %126 = vector.shape_cast %125 : vector<1x256xf32> to vector<256xf32>
    %127 = vector.shape_cast %126 : vector<256xf32> to vector<1x256xf32>
    %128 = vector.broadcast %127 : vector<1x256xf32> to vector<8x256xf32>
    %129 = arith.mulf %124, %128 : vector<8x256xf32>
    %c64 = arith.constant 64 : index
    %c0_45 = arith.constant 0 : index
    %130 = vector.load %arg12[%c64, %c0_45] : memref<72x256xf32, #tpu.memory_space<vmem>>, vector<8x256xf32>
    tpu.vector_store %arg12[%c64, %c0_45], %129 {strides = array<i32>} : memref<72x256xf32, #tpu.memory_space<vmem>>, vector<8x256xf32>,
    %c0_46 = arith.constant 0 : index
    %c0_47 = arith.constant 0 : index
    %131 = vector.load %arg12[%c0_46, %c0_47] : memref<72x256xf32, #tpu.memory_space<vmem>>, vector<72x256xf32>
    %c0_48 = arith.constant 0 : index
    %c0_49 = arith.constant 0 : index
    %132 = vector.load %arg4[%c0_48, %c0_49] : memref<8x72xf32, #tpu.memory_space<vmem>>, vector<8x72xf32>
    %cst_50 = arith.constant dense<0.000000e+00> : vector<8x256xf32>
    %133 = tpu.matmul %132, %131, %cst_50 {dimension_numbers = #tpu.dot_dimension_numbers<[1], [0], [0], [1], [0, 0, 1, 1], [], []>} : vector<8x72xf32>, vector<72x256xf32>, vector<8x256xf32> -> vector<8x256xf32>
    %c0_51 = arith.constant 0 : index
    %c0_52 = arith.constant 0 : index
    %134 = vector.load %arg5[%c0_51, %c0_52] : memref<8x1xf32, #tpu.memory_space<vmem>>, vector<8x1xf32>
    %135 = vector.broadcast %134 : vector<8x1xf32> to vector<8x256xf32>
    %136 = arith.addf %133, %135 : vector<8x256xf32>
    %cst_53 = arith.constant 0.000000e+00 : f32
    %137 = vector.broadcast %cst_53 : f32 to vector<8x256xf32>
    %138 = arith.cmpf oge, %136, %137 : vector<8x256xf32>
    %139 = vector.broadcast %1 : f32 to vector<8x256xf32>
    %140 = arith.mulf %139, %136 : vector<8x256xf32>
    %141 = arith.select %138, %136, %140 : vector<8x256xi1>, vector<8x256xf32>
    %142 = tpu.iota {dimensions = array<i32: 0>} : vector<8x1xi32>
    %143 = vector.shape_cast %3 : vector<1x256xf32> to vector<256xf32>
    %144 = vector.shape_cast %143 : vector<256xf32> to vector<1x256xf32>
    %145 = vector.broadcast %144 : vector<1x256xf32> to vector<8x256xf32>
    %146 = arith.mulf %141, %145 : vector<8x256xf32>
    %cst_54 = arith.constant dense<0.000000e+00> : vector<8xf32>
    %147 = vector.multi_reduction <add>, %146, %cst_54 [1] : vector<8x256xf32> to vector<8xf32>
    %148 = vector.shape_cast %147 : vector<8xf32> to vector<8x1xf32>
    %cst_55 = arith.constant 3.906250e-03 : f32
    %149 = vector.broadcast %cst_55 : f32 to vector<8x1xf32>
    %150 = arith.mulf %148, %149 : vector<8x1xf32>
    %cst_56 = arith.constant 0.000000e+00 : f32
    %151 = vector.broadcast %cst_56 : f32 to vector<8x1xf32>
    %c1_i32_57 = arith.constant 1 : i32
    %152 = tpu.dynamic_rotate %150 by %c1_i32_57 dim 0 : vector<8x1xf32>, i32 -> vector<8x1xf32>
    %c-1_i32 = arith.constant -1 : i32
    %153 = vector.broadcast %c-1_i32 : i32 to vector<8x1xi32>
    %154 = arith.addi %142, %153 : vector<8x1xi32>
    %c0_i32 = arith.constant 0 : i32
    %155 = vector.broadcast %c0_i32 : i32 to vector<8x1xi32>
    %156 = arith.cmpi sge, %154, %155 : vector<8x1xi32>
    %c-1_i32_58 = arith.constant -1 : i32
    %157 = vector.broadcast %c-1_i32_58 : i32 to vector<8x1xi32>
    %158 = arith.addi %142, %157 : vector<8x1xi32>
    %c8_i32 = arith.constant 8 : i32
    %159 = vector.broadcast %c8_i32 : i32 to vector<8x1xi32>
    %160 = arith.cmpi slt, %158, %159 : vector<8x1xi32>
    %161 = arith.andi %156, %160 : vector<8x1xi1>
    %cst_59 = arith.constant 0.000000e+00 : f32
    %162 = vector.broadcast %cst_59 : f32 to vector<8x1xf32>
    %163 = arith.select %161, %152, %162 : vector<8x1xi1>, vector<8x1xf32>
    %c0_60 = arith.constant 0 : index
    %164 = memref.load %arg8[%c0_60] : memref<3xf32, #tpu.memory_space<smem>>
    %165 = vector.broadcast %164 : f32 to vector<8x1xf32>
    %166 = arith.mulf %165, %163 : vector<8x1xf32>
    %167 = arith.addf %151, %166 : vector<8x1xf32>
    %c1_61 = arith.constant 1 : index
    %168 = memref.load %arg8[%c1_61] : memref<3xf32, #tpu.memory_space<smem>>
    %169 = vector.broadcast %168 : f32 to vector<8x1xf32>
    %170 = arith.mulf %169, %150 : vector<8x1xf32>
    %171 = arith.addf %167, %170 : vector<8x1xf32>
    %c7_i32 = arith.constant 7 : i32
    %172 = tpu.dynamic_rotate %150 by %c7_i32 dim 0 : vector<8x1xf32>, i32 -> vector<8x1xf32>
    %c1_i32_62 = arith.constant 1 : i32
    %173 = vector.broadcast %c1_i32_62 : i32 to vector<8x1xi32>
    %174 = arith.addi %142, %173 : vector<8x1xi32>
    %c0_i32_63 = arith.constant 0 : i32
    %175 = vector.broadcast %c0_i32_63 : i32 to vector<8x1xi32>
    %176 = arith.cmpi sge, %174, %175 : vector<8x1xi32>
    %c1_i32_64 = arith.constant 1 : i32
    %177 = vector.broadcast %c1_i32_64 : i32 to vector<8x1xi32>
    %178 = arith.addi %142, %177 : vector<8x1xi32>
    %c8_i32_65 = arith.constant 8 : i32
    %179 = vector.broadcast %c8_i32_65 : i32 to vector<8x1xi32>
    %180 = arith.cmpi slt, %178, %179 : vector<8x1xi32>
    %181 = arith.andi %176, %180 : vector<8x1xi1>
    %cst_66 = arith.constant 0.000000e+00 : f32
    %182 = vector.broadcast %cst_66 : f32 to vector<8x1xf32>
    %183 = arith.select %181, %172, %182 : vector<8x1xi1>, vector<8x1xf32>
    %c2 = arith.constant 2 : index
    %184 = memref.load %arg8[%c2] : memref<3xf32, #tpu.memory_space<smem>>
    %185 = vector.broadcast %184 : f32 to vector<8x1xf32>
    %186 = arith.mulf %185, %183 : vector<8x1xf32>
    %187 = arith.addf %171, %186 : vector<8x1xf32>
    %188 = arith.negf %187 : vector<8x1xf32>
    %189 = math.exp %188 : vector<8x1xf32>
    %cst_67 = arith.constant 1.000000e+00 : f32
    %190 = vector.broadcast %cst_67 : f32 to vector<8x1xf32>
    %191 = arith.addf %190, %189 : vector<8x1xf32>
    %192 = arith.divf %190, %191 : vector<8x1xf32>
    %193 = vector.broadcast %192 : vector<8x1xf32> to vector<8x256xf32>
    %194 = vector.broadcast %144 : vector<1x256xf32> to vector<8x256xf32>
    %195 = arith.mulf %193, %194 : vector<8x256xf32>
    %196 = arith.mulf %141, %195 : vector<8x256xf32>
    %197 = vector.shape_cast %196 : vector<8x256xf32> to vector<1x8x256xf32>
    %c0_68 = arith.constant 0 : index
    %c0_69 = arith.constant 0 : index
    %c0_70 = arith.constant 0 : index
    %198 = vector.load %arg10[%c0_68, %c0_69, %c0_70] : memref<1x8x256xf32, #tpu.memory_space<vmem>>, vector<1x8x256xf32>
    tpu.vector_store %arg10[%c0_68, %c0_69, %c0_70], %197 {strides = array<i32>} : memref<1x8x256xf32, #tpu.memory_space<vmem>>, vector<1x8x256xf32>,
    return
  }
  func.func @transform_0(%arg0: i32) -> (i32, i32, i32) {
    %c0_i32 = arith.constant 0 : i32
    %c0_i32_0 = arith.constant 0 : i32
    %c0_i32_1 = arith.constant 0 : i32
    return %arg0, %c0_i32, %c0_i32_0 : i32, i32, i32
  }
  func.func @transform_1(%arg0: i32) -> (i32, i32) {
    %c0_i32 = arith.constant 0 : i32
    %c0_i32_0 = arith.constant 0 : i32
    %c0_i32_1 = arith.constant 0 : i32
    return %c0_i32, %c0_i32_0 : i32, i32
  }
  func.func @transform_2(%arg0: i32) -> (i32, i32) {
    %c0_i32 = arith.constant 0 : i32
    %c0_i32_0 = arith.constant 0 : i32
    %c0_i32_1 = arith.constant 0 : i32
    return %c0_i32, %c0_i32_0 : i32, i32
  }
  func.func @transform_3(%arg0: i32) -> (i32, i32) {
    %c0_i32 = arith.constant 0 : i32
    %c0_i32_0 = arith.constant 0 : i32
    %c0_i32_1 = arith.constant 0 : i32
    return %c0_i32, %c0_i32_0 : i32, i32
  }
  func.func @transform_4(%arg0: i32) -> (i32, i32) {
    %c0_i32 = arith.constant 0 : i32
    %c0_i32_0 = arith.constant 0 : i32
    %c0_i32_1 = arith.constant 0 : i32
    return %c0_i32, %c0_i32_0 : i32, i32
  }
  func.func @transform_5(%arg0: i32) -> (i32, i32) {
    %c0_i32 = arith.constant 0 : i32
    %c0_i32_0 = arith.constant 0 : i32
    %c0_i32_1 = arith.constant 0 : i32
    return %c0_i32, %c0_i32_0 : i32, i32
  }
  func.func @transform_6(%arg0: i32) -> (i32, i32) {
    %c0_i32 = arith.constant 0 : i32
    %c0_i32_0 = arith.constant 0 : i32
    %c0_i32_1 = arith.constant 0 : i32
    return %c0_i32, %c0_i32_0 : i32, i32
  }
  func.func @transform_7(%arg0: i32) -> i32 {
    %c0_i32 = arith.constant 0 : i32
    %c0_i32_0 = arith.constant 0 : i32
    return %c0_i32 : i32
  }
  func.func @transform_8(%arg0: i32) -> i32 {
    %c0_i32 = arith.constant 0 : i32
    %c0_i32_0 = arith.constant 0 : i32
    return %c0_i32 : i32
  }
  func.func @transform_9(%arg0: i32) -> (i32, i32, i32) {
    %c0_i32 = arith.constant 0 : i32
    %c0_i32_0 = arith.constant 0 : i32
    %c0_i32_1 = arith.constant 0 : i32
    return %arg0, %c0_i32, %c0_i32_0 : i32, i32, i32
  }
}

</mosaic_0001>

<llo_original>
// kernel: tpu_custom_call.1
$region0: #{tpu_custom_call.1}
  #allocation0 [shape = 'u32[]', space=smem, size = 0x4, offset = 0x4, fixed_abs, tag = 'smem constant byte address 0x4 - core index']
  #allocation1 [shape = 'u32[144,128]{1,0:T(1,128)}', space=vmem, size = 0x12000, scoped, tag = 'internal scratch']
  #allocation2 [shape = 'f32[36,256]{1,0:T(8,128)}', space=vmem, size = 0xa000, scoped, tag = 'scratch operand']
  #allocation3 [shape = 'f32[72,256]{1,0:T(8,128)}', space=vmem, size = 0x12000, scoped, tag = 'scratch operand']
  %s0 = inlined_call_operand.vmem [shape: f32[2,4,256], index: 0, kind: input, shape index: {}]
  %s1 = inlined_call_operand.hbm [shape: f32[8,36], index: 1, kind: input, shape index: {}]
  %s2 = inlined_call_operand.vmem [shape: f32[8,1], index: 2, kind: input, shape index: {}]
  %s3 = inlined_call_operand.hbm [shape: f32[8,72], index: 3, kind: input, shape index: {}]
  %s4 = inlined_call_operand.vmem [shape: f32[8,1], index: 4, kind: input, shape index: {}]
  %s5 = inlined_call_operand.vmem [shape: f32[8,256], index: 5, kind: input, shape index: {}]
  %s6 = inlined_call_operand.vmem [shape: f32[1,256], index: 6, kind: input, shape index: {}]
  %s7 = inlined_call_operand.vmem [shape: f32[3], index: 7, kind: input, shape index: {}]
  %s8 = inlined_call_operand.vmem [shape: f32[2], index: 8, kind: input, shape index: {}]
  %s9 = inlined_call_operand.hbm [shape: f32[2,8,256], index: 9, kind: output, shape index: {}]
  %s10 = sld [smem:[#allocation0]]
  $region85: #{tpu_custom_call.1} parent=0
    _
  %s12 = ssub.s32 1, %s10
  %s13 = scalar_select 0, %s12, %s10
  $region1: #{tpu_custom_call.1} parent=0
    #allocation4 [shape = 'u8[4096]{0}', space=vmem, size = 0x1000, scoped, tag = 'input window, operand 1, single buffered']
    #allocation5 [shape = 's32[2]{0}', space=sflag, size = 0x8, scoped, tag = 'scoped memory for tpu_custom_call.1']
    #allocation6 [shape = 's32[2]{0}', space=sflag, size = 0x8, scoped, tag = 'scoped memory for tpu_custom_call.1']
    #allocation7 [shape = 's32[2]{0}', space=sflag, size = 0x8, scoped, tag = 'scoped memory for tpu_custom_call.1']
    #allocation8 [shape = 'u8[4096]{0}', space=vmem, size = 0x1000, scoped, tag = 'input window, operand 3, single buffered']
    #allocation9 [shape = 's32[1]{0}', space=sflag, size = 0x4, scoped, tag = 'scoped memory for tpu_custom_call.1']
    #allocation10 [shape = 'u8[512]{0}', space=smem, size = 0x200, scoped, tag = 'input window, operand 7, single buffered']
    #allocation11 [shape = 'u8[512]{0}', space=smem, size = 0x200, scoped, tag = 'input window, operand 8, single buffered']
    #allocation12 [shape = 's32[1]{0}', space=sflag, size = 0x4, scoped, tag = 'scoped memory for tpu_custom_call.1']
    #allocation13 [shape = 'u8[16384]{0}', space=vmem, size = 0x4000, scoped, tag = 'output window, operand 0']
    %14 = vsyncpa [#allocation5], 0
    %15 = vsyncpa [#allocation9], 0
    %16 = vsyncpa [#allocation7], 0
    %17 = vsyncpa [#allocation12], 0
    %18 = vsyncpa [#allocation6], 0
    %s19 = scalar_lea.sflag [#allocation6], 1
    %20 = vsyncpa %s19, 0
    loop: start=0, step=1, limit=4
    $region2: #{tpu_custom_call.1} parent=1 // loop_pre_header
      _
    $region3: #{tpu_custom_call.1} parent=1 // loop_header
      %s22 = sphi 0, %s26
      %p23 = scmp.ge.s32.totalorder %s22, 4
      %s32 = sphi 0, %s34
      %s35 = sphi 0, %s32
      %s36 = sphi 0, %s35
      %s52 = sphi 0, %s36
      %s56 = sphi 0, %s56
      %s58 = sphi 0, %s56
      %s59 = sphi 0, %s58
      %s73 = sphi 0, %s59
      %s77 = sphi 0, %s77
      %s79 = sphi 0, %s77
      %s80 = sphi 0, %s79
      %s94 = sphi 0, %s80
      %s98 = sphi 0, %s98
      %s100 = sphi 0, %s98
      %s101 = sphi 0, %s100
      %s115 = sphi 0, %s101
      %s119 = sphi 0, %s119
      %s121 = sphi 0, %s119
      %s122 = sphi 0, %s121
      %s136 = sphi 0, %s122
      %s140 = sphi 0, %s140
      %s142 = sphi 0, %s140
      %s143 = sphi 0, %s142
      %s157 = sphi 0, %s143
      %s161 = sphi 0, %s161
      %s163 = sphi 0, %s161
      %s164 = sphi 0, %s163
      %s178 = sphi 0, %s164
      %s182 = sphi 0, %s182
      %s184 = sphi 0, %s182
      %s185 = sphi 0, %s184
      %s199 = sphi 0, %s185
      %s203 = sphi 0, %s203
      %s205 = sphi 0, %s203
      %s206 = sphi 0, %s205
      %s220 = sphi 0, %s206
      %s226 = sphi 0, %s228
      %s229 = sphi 0, %s226
      %s230 = sphi 0, %s229
      %s246 = sphi 0, %s230
    $region4: #{tpu_custom_call.1} parent=1 // loop_header_branch
      %25 = sbr.rel (%p23) target = $region8
    $region5: #{tpu_custom_call.1} parent=1 // loop_body
      %s27 = ssub.s32 %s22, 1
      %s28 = ssub.s32 %s22, 2
      %s29 = sadd.s32 %s22, 1
      %s30 = ssub.s32 %s22, %s29
      %p31 = scmp.eq.s32.totalorder %s30, 0
      %s33 = sadd.s32 %s32, 1
      %s34 = scalar_select %p31, %s32, %s33
      %p37 = pneg %p31
      %p38 = scmp.eq.s32.totalorder %s22, 1
      %p39 = por %p37, %p38
      %p40 = scmp.ne.s32.totalorder %s32, %s35
      %p41 = scmp.eq.s32.totalorder %s22, 0
      %p42 = por %p40, %p41
      %p43 = scmp.ne.s32.totalorder %s32, %s35
      %p44 = scmp.eq.s32.totalorder %s27, 1
      %p45 = por %p43, %p44
      %p46 = scmp.ne.s32.totalorder %s35, %s36
      %p47 = scmp.eq.s32.totalorder %s27, 0
      %p48 = por %p46, %p47
      %p49 = scmp.ne.s32.totalorder %s35, %s36
      %p50 = scmp.eq.s32.totalorder %s28, 1
      %p51 = por %p49, %p50
      %p53 = scmp.ne.s32.totalorder %s36, %s52
      %p54 = scmp.eq.s32.totalorder %s28, 0
      %p55 = por %p53, %p54
      %s57 = sadd.s32 %s56, 1
      %p60 = scmp.eq.s32.totalorder %s22, 1
      %p61 = scmp.ne.s32.totalorder %s56, %s58
      %p62 = scmp.eq.s32.totalorder %s22, 0
      %p63 = por %p61, %p62
      %p64 = scmp.ne.s32.totalorder %s56, %s58
      %p65 = scmp.eq.s32.totalorder %s27, 1
      %p66 = por %p64, %p65
      %p67 = scmp.ne.s32.totalorder %s58, %s59
      %p68 = scmp.eq.s32.totalorder %s27, 0
      %p69 = por %p67, %p68
      %p70 = scmp.ne.s32.totalorder %s58, %s59
      %p71 = scmp.eq.s32.totalorder %s28, 1
      %p72 = por %p70, %p71
      %p74 = scmp.ne.s32.totalorder %s59, %s73
      %p75 = scmp.eq.s32.totalorder %s28, 0
      %p76 = por %p74, %p75
      %s78 = sadd.s32 %s77, 1
      %p81 = scmp.eq.s32.totalorder %s22, 1
      %p82 = scmp.ne.s32.totalorder %s77, %s79
      %p83 = scmp.eq.s32.totalorder %s22, 0
      %p84 = por %p82, %p83
      %p85 = scmp.ne.s32.totalorder %s77, %s79
      %p86 = scmp.eq.s32.totalorder %s27, 1
      %p87 = por %p85, %p86
      %p88 = scmp.ne.s32.totalorder %s79, %s80
      %p89 = scmp.eq.s32.totalorder %s27, 0
      %p90 = por %p88, %p89
      %p91 = scmp.ne.s32.totalorder %s79, %s80
      %p92 = scmp.eq.s32.totalorder %s28, 1
      %p93 = por %p91, %p92
      %p95 = scmp.ne.s32.totalorder %s80, %s94
      %p96 = scmp.eq.s32.totalorder %s28, 0
      %p97 = por %p95, %p96
      %s99 = sadd.s32 %s98, 1
      %p102 = scmp.eq.s32.totalorder %s22, 1
      %p103 = scmp.ne.s32.totalorder %s98, %s100
      %p104 = scmp.eq.s32.totalorder %s22, 0
      %p105 = por %p103, %p104
      %p106 = scmp.ne.s32.totalorder %s98, %s100
      %p107 = scmp.eq.s32.totalorder %s27, 1
      %p108 = por %p106, %p107
      %p109 = scmp.ne.s32.totalorder %s100, %s101
      %p110 = scmp.eq.s32.totalorder %s27, 0
      %p111 = por %p109, %p110
      %p112 = scmp.ne.s32.totalorder %s100, %s101
      %p113 = scmp.eq.s32.totalorder %s28, 1
      %p114 = por %p112, %p113
      %p116 = scmp.ne.s32.totalorder %s101, %s115
      %p117 = scmp.eq.s32.totalorder %s28, 0
      %p118 = por %p116, %p117
      %s120 = sadd.s32 %s119, 1
      %p123 = scmp.eq.s32.totalorder %s22, 1
      %p124 = scmp.ne.s32.totalorder %s119, %s121
      %p125 = scmp.eq.s32.totalorder %s22, 0
      %p126 = por %p124, %p125
      %p127 = scmp.ne.s32.totalorder %s119, %s121
      %p128 = scmp.eq.s32.totalorder %s27, 1
      %p129 = por %p127, %p128
      %p130 = scmp.ne.s32.totalorder %s121, %s122
      %p131 = scmp.eq.s32.totalorder %s27, 0
      %p132 = por %p130, %p131
      %p133 = scmp.ne.s32.totalorder %s121, %s122
      %p134 = scmp.eq.s32.totalorder %s28, 1
      %p135 = por %p133, %p134
      %p137 = scmp.ne.s32.totalorder %s122, %s136
      %p138 = scmp.eq.s32.totalorder %s28, 0
      %p139 = por %p137, %p138
      %s141 = sadd.s32 %s140, 1
      %p144 = scmp.eq.s32.totalorder %s22, 1
      %p145 = scmp.ne.s32.totalorder %s140, %s142
      %p146 = scmp.eq.s32.totalorder %s22, 0
      %p147 = por %p145, %p146
      %p148 = scmp.ne.s32.totalorder %s140, %s142
      %p149 = scmp.eq.s32.totalorder %s27, 1
      %p150 = por %p148, %p149
      %p151 = scmp.ne.s32.totalorder %s142, %s143
      %p152 = scmp.eq.s32.totalorder %s27, 0
      %p153 = por %p151, %p152
      %p154 = scmp.ne.s32.totalorder %s142, %s143
      %p155 = scmp.eq.s32.totalorder %s28, 1
      %p156 = por %p154, %p155
      %p158 = scmp.ne.s32.totalorder %s143, %s157
      %p159 = scmp.eq.s32.totalorder %s28, 0
      %p160 = por %p158, %p159
      %s162 = sadd.s32 %s161, 1
      %p165 = scmp.eq.s32.totalorder %s22, 1
      %p166 = scmp.ne.s32.totalorder %s161, %s163
      %p167 = scmp.eq.s32.totalorder %s22, 0
      %p168 = por %p166, %p167
      %p169 = scmp.ne.s32.totalorder %s161, %s163
      %p170 = scmp.eq.s32.totalorder %s27, 1
      %p171 = por %p169, %p170
      %p172 = scmp.ne.s32.totalorder %s163, %s164
      %p173 = scmp.eq.s32.totalorder %s27, 0
      %p174 = por %p172, %p173
      %p175 = scmp.ne.s32.totalorder %s163, %s164
      %p176 = scmp.eq.s32.totalorder %s28, 1
      %p177 = por %p175, %p176
      %p179 = scmp.ne.s32.totalorder %s164, %s178
      %p180 = scmp.eq.s32.totalorder %s28, 0
      %p181 = por %p179, %p180
      %s183 = sadd.s32 %s182, 1
      %p186 = scmp.eq.s32.totalorder %s22, 1
      %p187 = scmp.ne.s32.totalorder %s182, %s184
      %p188 = scmp.eq.s32.totalorder %s22, 0
      %p189 = por %p187, %p188
      %p190 = scmp.ne.s32.totalorder %s182, %s184
      %p191 = scmp.eq.s32.totalorder %s27, 1
      %p192 = por %p190, %p191
      %p193 = scmp.ne.s32.totalorder %s184, %s185
      %p194 = scmp.eq.s32.totalorder %s27, 0
      %p195 = por %p193, %p194
      %p196 = scmp.ne.s32.totalorder %s184, %s185
      %p197 = scmp.eq.s32.totalorder %s28, 1
      %p198 = por %p196, %p197
      %p200 = scmp.ne.s32.totalorder %s185, %s199
      %p201 = scmp.eq.s32.totalorder %s28, 0
      %p202 = por %p200, %p201
      %s204 = sadd.s32 %s203, 1
      %p207 = scmp.eq.s32.totalorder %s22, 1
      %p208 = scmp.ne.s32.totalorder %s203, %s205
      %p209 = scmp.eq.s32.totalorder %s22, 0
      %p210 = por %p208, %p209
      %p211 = scmp.ne.s32.totalorder %s203, %s205
      %p212 = scmp.eq.s32.totalorder %s27, 1
      %p213 = por %p211, %p212
      %p214 = scmp.ne.s32.totalorder %s205, %s206
      %p215 = scmp.eq.s32.totalorder %s27, 0
      %p216 = por %p214, %p215
      %p217 = scmp.ne.s32.totalorder %s205, %s206
      %p218 = scmp.eq.s32.totalorder %s28, 1
      %p219 = por %p217, %p218
      %p221 = scmp.ne.s32.totalorder %s206, %s220
      %p222 = scmp.eq.s32.totalorder %s28, 0
      %p223 = por %p221, %p222
      %s224 = ssub.s32 %s22, %s29
      %p225 = scmp.eq.s32.totalorder %s224, 0
      %s227 = sadd.s32 %s226, 1
      %s228 = scalar_select %p225, %s226, %s227
      %p231 = pneg %p225
      %p232 = scmp.eq.s32.totalorder %s22, 1
      %p233 = por %p231, %p232
      %p234 = scmp.ne.s32.totalorder %s226, %s229
      %p235 = scmp.eq.s32.totalorder %s22, 0
      %p236 = por %p234, %p235
      %p237 = scmp.ne.s32.totalorder %s226, %s229
      %p238 = scmp.eq.s32.totalorder %s27, 1
      %p239 = por %p237, %p238
      %p240 = scmp.ne.s32.totalorder %s229, %s230
      %p241 = scmp.eq.s32.totalorder %s27, 0
      %p242 = por %p240, %p241
      %p243 = scmp.ne.s32.totalorder %s229, %s230
      %p244 = scmp.eq.s32.totalorder %s28, 1
      %p245 = por %p243, %p244
      %p247 = scmp.ne.s32.totalorder %s230, %s246
      %p248 = scmp.eq.s32.totalorder %s28, 0
      %p249 = por %p247, %p248
      %p250 = scmp.le.s32.totalorder 1, %s22
      %p251 = scmp.lt.s32.totalorder %s22, 3
      %p252 = pnand %p250, %p251
      %p253 = pneg %p252
      // Predicated region
      $region9: #{tpu_custom_call.1} parent=5 // pred_check
        _
      $region10: #{tpu_custom_call.1} parent=5 // pred_check_branch
        %255 = sbr.rel (%p252) target = $region12
      $region11: #{tpu_custom_call.1} parent=5 // pred_region
        %s256 = ssub.s32 %s22, 1
        // Predicated region
        $region13: #{tpu_custom_call.1} parent=11 // pred_check
          %p257 = pneg %p69
        $region14: #{tpu_custom_call.1} parent=11 // pred_check_branch
          %259 = sbr.rel (%p257) target = $region16
        $region15: #{tpu_custom_call.1} parent=11 // pred_region
          %s261 = ssub.s32 128, 128
          %262 = vsyncadd [#allocation5], %s261
          %s264 = sshll.u32 [#allocation4], 4
          %s265 = int_to_ptr.vmem [resolvable:$true] %s264
          %267 = dma.hbm_to_vmem [thread:$0]  %s1, 128, %s265, [#allocation5]
        $region16: #{tpu_custom_call.1} parent=11 // pred_fallthru
          _
        // Predicated region
        $region17: #{tpu_custom_call.1} parent=11 // pred_check
          %p268 = pneg %p90
        $region18: #{tpu_custom_call.1} parent=11 // pred_check_branch
          %270 = sbr.rel (%p268) target = $region20
        $region19: #{tpu_custom_call.1} parent=11 // pred_region
          _
        $region20: #{tpu_custom_call.1} parent=11 // pred_fallthru
          _
        // Predicated region
        $region21: #{tpu_custom_call.1} parent=11 // pred_check
          %p271 = pneg %p111
        $region22: #{tpu_custom_call.1} parent=11 // pred_check_branch
          %273 = sbr.rel (%p271) target = $region24
        $region23: #{tpu_custom_call.1} parent=11 // pred_region
          %s275 = ssub.s32 128, 128
          %276 = vsyncadd [#allocation9], %s275
          %s278 = sshll.u32 [#allocation8], 4
          %s279 = int_to_ptr.vmem [resolvable:$true] %s278
          %281 = dma.hbm_to_vmem [thread:$0]  %s3, 128, %s279, [#allocation9]
        $region24: #{tpu_custom_call.1} parent=11 // pred_fallthru
          _
        // Predicated region
        $region25: #{tpu_custom_call.1} parent=11 // pred_check
          %p282 = pneg %p132
        $region26: #{tpu_custom_call.1} parent=11 // pred_check_branch
          %284 = sbr.rel (%p282) target = $region28
        $region27: #{tpu_custom_call.1} parent=11 // pred_region
          _
        $region28: #{tpu_custom_call.1} parent=11 // pred_fallthru
          _
        // Predicated region
        $region29: #{tpu_custom_call.1} parent=11 // pred_check
          %p285 = pneg %p153
        $region30: #{tpu_custom_call.1} parent=11 // pred_check_branch
          %287 = sbr.rel (%p285) target = $region32
        $region31: #{tpu_custom_call.1} parent=11 // pred_region
          _
        $region32: #{tpu_custom_call.1} parent=11 // pred_fallthru
          _
        // Predicated region
        $region33: #{tpu_custom_call.1} parent=11 // pred_check
          %p288 = pneg %p174
        $region34: #{tpu_custom_call.1} parent=11 // pred_check_branch
          %290 = sbr.rel (%p288) target = $region36
        $region35: #{tpu_custom_call.1} parent=11 // pred_region
          _
        $region36: #{tpu_custom_call.1} parent=11 // pred_fallthru
          _
        // Predicated region
        $region37: #{tpu_custom_call.1} parent=11 // pred_check
          %p291 = pneg %p195
        $region38: #{tpu_custom_call.1} parent=11 // pred_check_branch
          %293 = sbr.rel (%p291) target = $region40
        $region39: #{tpu_custom_call.1} parent=11 // pred_region
          %s295 = ssub.s32 16, 16
          %296 = vsyncadd [#allocation7], %s295
          %s298 = sshll.u32 %s7, 4
          %s299 = int_to_ptr.vmem [resolvable:$true] %s298
          %301 = dma.vmem_to_smem %s299, 16, [#allocation10], [#allocation7]
        $region40: #{tpu_custom_call.1} parent=11 // pred_fallthru
          _
        // Predicated region
        $region41: #{tpu_custom_call.1} parent=11 // pred_check
          %p302 = pneg %p216
        $region42: #{tpu_custom_call.1} parent=11 // pred_check_branch
          %304 = sbr.rel (%p302) target = $region44
        $region43: #{tpu_custom_call.1} parent=11 // pred_region
          %s306 = ssub.s32 16, 16
          %307 = vsyncadd [#allocation12], %s306
          %s309 = sshll.u32 %s8, 4
          %s310 = int_to_ptr.vmem [resolvable:$true] %s309
          %312 = dma.vmem_to_smem %s310, 16, [#allocation11], [#allocation12]
        $region44: #{tpu_custom_call.1} parent=11 // pred_fallthru
          _
      $region12: #{tpu_custom_call.1} parent=5 // pred_fallthru
        _
      %p313 = scmp.lt.s32.totalorder %s22, 2
      // Predicated region
      $region45: #{tpu_custom_call.1} parent=5 // pred_check
        %p314 = pneg %p313
      $region46: #{tpu_custom_call.1} parent=5 // pred_check_branch
        %316 = sbr.rel (%p314) target = $region48
      $region47: #{tpu_custom_call.1} parent=5 // pred_region
        // Predicated region
        $region49: #{tpu_custom_call.1} parent=47 // pred_check
          %p317 = pneg %p42
        $region50: #{tpu_custom_call.1} parent=47 // pred_check_branch
          %319 = sbr.rel (%p317) target = $region52
        $region51: #{tpu_custom_call.1} parent=47 // pred_region
          %p320 = scmp.lt.s32.totalorder %s22, 1
          %s321 = scalar_select %p320, %s22, 1
          %s322 = smul.addr %s321, 2
          %s323 = smul.addr %s322, 4
          %s324 = scalar_lea.vmem %s0, %s323
        $region52: #{tpu_custom_call.1} parent=47 // pred_fallthru
          _
      $region48: #{tpu_custom_call.1} parent=5 // pred_fallthru
        _
      %p325 = scmp.le.s32.totalorder 1, %s22
      %p326 = scmp.lt.s32.totalorder %s22, 3
      %p327 = pnand %p325, %p326
      %p328 = pneg %p327
      // Predicated region
      $region53: #{tpu_custom_call.1} parent=5 // pred_check
        _
      $region54: #{tpu_custom_call.1} parent=5 // pred_check_branch
        %330 = sbr.rel (%p327) target = $region56
      $region55: #{tpu_custom_call.1} parent=5 // pred_region
        %s331 = ssub.s32 %s22, 1
        // Predicated region
        $region57: #{tpu_custom_call.1} parent=55 // pred_check
          %p332 = pneg %p69
        $region58: #{tpu_custom_call.1} parent=55 // pred_check_branch
          %334 = sbr.rel (%p332) target = $region60
        $region59: #{tpu_custom_call.1} parent=55 // pred_region
          %335 = dma.done [#allocation5], 128
        $region60: #{tpu_custom_call.1} parent=55 // pred_fallthru
          _
        // Predicated region
        $region61: #{tpu_custom_call.1} parent=55 // pred_check
          %p336 = pneg %p111
        $region62: #{tpu_custom_call.1} parent=55 // pred_check_branch
          %338 = sbr.rel (%p336) target = $region64
        $region63: #{tpu_custom_call.1} parent=55 // pred_region
          %339 = dma.done [#allocation9], 128
        $region64: #{tpu_custom_call.1} parent=55 // pred_fallthru
          _
        // Predicated region
        $region65: #{tpu_custom_call.1} parent=55 // pred_check
          %p340 = pneg %p195
        $region66: #{tpu_custom_call.1} parent=55 // pred_check_branch
          %342 = sbr.rel (%p340) target = $region68
        $region67: #{tpu_custom_call.1} parent=55 // pred_region
          %343 = dma.done [#allocation7], 16
        $region68: #{tpu_custom_call.1} parent=55 // pred_fallthru
          _
        // Predicated region
        $region69: #{tpu_custom_call.1} parent=55 // pred_check
          %p344 = pneg %p216
        $region70: #{tpu_custom_call.1} parent=55 // pred_check_branch
          %346 = sbr.rel (%p344) target = $region72
        $region71: #{tpu_custom_call.1} parent=55 // pred_region
          %347 = dma.done [#allocation12], 16
        $region72: #{tpu_custom_call.1} parent=55 // pred_fallthru
          _
        %348 = sfence
        %p349 = scmp.lt.s32.totalorder %s27, 1
        %s350 = scalar_select %p349, %s27, 1
        %s351 = smul.addr %s350, 2
        %s352 = smul.addr %s351, 4
        %s353 = scalar_lea.vmem %s0, %s352
        %p354 = pneg %p48
        %p355 = pneg %p45
        %p356 = pneg %p69
        %p357 = pneg %p66
        %p358 = pneg %p90
        %p359 = pneg %p87
        %p360 = pneg %p111
        %p361 = pneg %p108
        %p362 = pneg %p132
        %p363 = pneg %p129
        %p364 = pneg %p153
        %p365 = pneg %p150
        %p366 = pneg %p174
        %p367 = pneg %p171
        %p368 = pneg %p195
        %p369 = pneg %p192
        %p370 = pneg %p216
        %p371 = pneg %p213
        %p372 = pneg %p242
        %p373 = pneg %p239
        %s374 = sand.u32 %s229, 1
        %s375 = scalar_lea.sflag [#allocation6], %s374
        %s376 = sand.u32 %s229, 1
        %s377 = smul.addr %s376, 16
        %s378 = scalar_lea.vmem [#allocation13], %s377
        %p379 = scmp.lt.s32.totalorder %s27, 1
        %s380 = scalar_select %p379, %s27, 1
        %s381 = smul.addr %s380, 2
        %s382 = smul.addr %s381, 4
        %s383 = scalar_lea.vmem %s0, %s382
        %s384 = sld [smem:[#allocation11]]
        %s385 = sld [smem:[#allocation11 + $0x1]]
        %v386 = vld [vmem:[%s5] sm:$0xff]
        %v387 = vld [vmem:[%s5 + $0x8] sm:$0xff]
        %v388 = vld [vmem:[%s6] sm:$0x3]
        %v389 = vld [vmem:[%s383] sm:$0xff]
        %v391 = vcombine.high %v389, %v389
        %393 = vrot.lane.b32.xlu0 %v389, 17
        %v394 = vpop.permute.xlu0 %393
        %395 = vrot.lane.b32.xlu0 %v391, 17
        %v396 = vpop.permute.xlu0 %395
        %v397 = vlaneseq
        %v398 = vand.u32 %v397, 127
        %vm399 = vcmp.lt.s32.totalorder %v398, 17
        %v400 = vsel %vm399, %v394, %v396
        %v401 = vsel %vm399, %v396, %v394
        %v402 = vlaneseq
        %v403 = vshrl.u32 %v402, 7
        %v404 = vsub.s32 0, %v403
        %v405 = vrot.slane %v386, %v404
        %v406 = vlaneseq
        %v407 = vshrl.u32 %v406, 7
        %v408 = vsub.s32 0, %v407
        %v409 = vrot.slane %v387, %v408
        %v410 = vmul.f32 %v401, %v405
        %v411 = vmul.f32 %v400, %v409
        %412 = vst [vmem:[#allocation2] sm:$0xf] %v410
        %413 = vst [vmem:[#allocation2 + $0x8] sm:$0xf] %v411
        %414 = vrot.lane.b32.xlu0 %v389, 16
        %v415 = vpop.permute.xlu0 %414
        %416 = vrot.lane.b32.xlu0 %v391, 16
        %v417 = vpop.permute.xlu0 %416
        %vm418 = vcmp.lt.s32.totalorder %v398, 16
        %v419 = vsel %vm418, %v415, %v417
        %v420 = vsel %vm418, %v417, %v415
        %v421 = vlaneseq
        %v422 = vshrl.u32 %v421, 7
        %v423 = vsub.s32 1, %v422
        %v424 = vrot.slane %v386, %v423
        %v425 = vlaneseq
        %v426 = vshrl.u32 %v425, 7
        %v427 = vsub.s32 1, %v426
        %v428 = vrot.slane %v387, %v427
        %v429 = vmul.f32 %v420, %v424
        %v430 = vmul.f32 %v419, %v428
        %v433 = vrot.slane %v429, 4
        %v434 = vrot.slane %v430, 4
        %437 = vst [vmem:[#allocation2] sm:$0xf0] %v433
        %438 = vst [vmem:[#allocation2 + $0x8] sm:$0xf0] %v434
        %439 = vrot.lane.b32.xlu0 %v389, 15
        %v440 = vpop.permute.xlu0 %439
        %441 = vrot.lane.b32.xlu0 %v391, 15
        %v442 = vpop.permute.xlu0 %441
        %vm443 = vcmp.lt.s32.totalorder %v398, 15
        %v444 = vsel %vm443, %v440, %v442
        %v445 = vsel %vm443, %v442, %v440
        %v446 = vlaneseq
        %v447 = vshrl.u32 %v446, 7
        %v448 = vsub.s32 2, %v447
        %v449 = vrot.slane %v386, %v448
        %v450 = vlaneseq
        %v451 = vshrl.u32 %v450, 7
        %v452 = vsub.s32 2, %v451
        %v453 = vrot.slane %v387, %v452
        %v454 = vmul.f32 %v445, %v449
        %v455 = vmul.f32 %v444, %v453
        %456 = vst [vmem:[#allocation2 + $0x10] sm:$0xf] %v454
        %457 = vst [vmem:[#allocation2 + $0x18] sm:$0xf] %v455
        %458 = vrot.lane.b32.xlu0 %v389, 1
        %v459 = vpop.permute.xlu0 %458
        %460 = vrot.lane.b32.xlu0 %v391, 1
        %v461 = vpop.permute.xlu0 %460
        %vm462 = vcmp.lt.s32.totalorder %v398, 1
        %v463 = vsel %vm462, %v459, %v461
        %v464 = vsel %vm462, %v461, %v459
        %v465 = vlaneseq
        %v466 = vshrl.u32 %v465, 7
        %v467 = vsub.s32 3, %v466
        %v468 = vrot.slane %v386, %v467
        %v469 = vlaneseq
        %v470 = vshrl.u32 %v469, 7
        %v471 = vsub.s32 3, %v470
        %v472 = vrot.slane %v387, %v471
        %v473 = vmul.f32 %v464, %v468
        %v474 = vmul.f32 %v463, %v472
        %v477 = vrot.slane %v473, 4
        %v478 = vrot.slane %v474, 4
        %481 = vst [vmem:[#allocation2 + $0x10] sm:$0xf0] %v477
        %482 = vst [vmem:[#allocation2 + $0x18] sm:$0xf0] %v478
        %483 = vst [vmem:[#allocation2 + $0x20] sm:$0xf] %v389
        %484 = vst [vmem:[#allocation2 + $0x28] sm:$0xf] %v391
        %485 = vrot.lane.b32.xlu0 %v389, 127
        %v486 = vpop.permute.xlu0 %485
        %487 = vrot.lane.b32.xlu0 %v391, 127
        %v488 = vpop.permute.xlu0 %487
        %vm489 = vcmp.lt.s32.totalorder %v398, 127
        %v490 = vsel %vm489, %v486, %v488
        %v491 = vsel %vm489, %v488, %v486
        %v492 = vlaneseq
        %v493 = vshrl.u32 %v492, 7
        %v494 = vsub.s32 4, %v493
        %v495 = vrot.slane %v386, %v494
        %v496 = vlaneseq
        %v497 = vshrl.u32 %v496, 7
        %v498 = vsub.s32 4, %v497
        %v499 = vrot.slane %v387, %v498
        %v500 = vmul.f32 %v490, %v495
        %v501 = vmul.f32 %v491, %v499
        %v504 = vrot.slane %v500, 4
        %v505 = vrot.slane %v501, 4
        %508 = vst [vmem:[#allocation2 + $0x20] sm:$0xf0] %v504
        %509 = vst [vmem:[#allocation2 + $0x28] sm:$0xf0] %v505
        %510 = vrot.lane.b32.xlu0 %v389, 113
        %v511 = vpop.permute.xlu0 %510
        %512 = vrot.lane.b32.xlu0 %v391, 113
        %v513 = vpop.permute.xlu0 %512
        %vm514 = vcmp.lt.s32.totalorder %v398, 113
        %v515 = vsel %vm514, %v511, %v513
        %v516 = vsel %vm514, %v513, %v511
        %v517 = vlaneseq
        %v518 = vshrl.u32 %v517, 7
        %v519 = vsub.s32 5, %v518
        %v520 = vrot.slane %v386, %v519
        %v521 = vlaneseq
        %v522 = vshrl.u32 %v521, 7
        %v523 = vsub.s32 5, %v522
        %v524 = vrot.slane %v387, %v523
        %v525 = vmul.f32 %v515, %v520
        %v526 = vmul.f32 %v516, %v524
        %527 = vst [vmem:[#allocation2 + $0x30] sm:$0xf] %v525
        %528 = vst [vmem:[#allocation2 + $0x38] sm:$0xf] %v526
        %529 = vrot.lane.b32.xlu0 %v389, 112
        %v530 = vpop.permute.xlu0 %529
        %531 = vrot.lane.b32.xlu0 %v391, 112
        %v532 = vpop.permute.xlu0 %531
        %vm533 = vcmp.lt.s32.totalorder %v398, 112
        %v534 = vsel %vm533, %v530, %v532
        %v535 = vsel %vm533, %v532, %v530
        %v536 = vlaneseq
        %v537 = vshrl.u32 %v536, 7
        %v538 = vsub.s32 6, %v537
        %v539 = vrot.slane %v386, %v538
        %v540 = vlaneseq
        %v541 = vshrl.u32 %v540, 7
        %v542 = vsub.s32 6, %v541
        %v543 = vrot.slane %v387, %v542
        %v544 = vmul.f32 %v534, %v539
        %v545 = vmul.f32 %v535, %v543
        %v548 = vrot.slane %v544, 4
        %v549 = vrot.slane %v545, 4
        %552 = vst [vmem:[#allocation2 + $0x30] sm:$0xf0] %v548
        %553 = vst [vmem:[#allocation2 + $0x38] sm:$0xf0] %v549
        %554 = vrot.lane.b32.xlu0 %v389, 111
        %v555 = vpop.permute.xlu0 %554
        %556 = vrot.lane.b32.xlu0 %v391, 111
        %v557 = vpop.permute.xlu0 %556
        %vm558 = vcmp.lt.s32.totalorder %v398, 111
        %v559 = vsel %vm558, %v555, %v557
        %v560 = vsel %vm558, %v557, %v555
        %v561 = vlaneseq
        %v562 = vshrl.u32 %v561, 7
        %v563 = vsub.s32 7, %v562
        %v564 = vrot.slane %v386, %v563
        %v565 = vlaneseq
        %v566 = vshrl.u32 %v565, 7
        %v567 = vsub.s32 7, %v566
        %v568 = vrot.slane %v387, %v567
        %v569 = vmul.f32 %v559, %v564
        %v570 = vmul.f32 %v560, %v568
        %571 = vst [vmem:[#allocation2 + $0x40] sm:$0xf] %v569
        %572 = vst [vmem:[#allocation2 + $0x48] sm:$0xf] %v570
        %v573 = vld [vmem:[#allocation2] sm:$0xff]
        %v574 = vld [vmem:[#allocation2 + $0x8] sm:$0xff]
        %v575 = vld [vmem:[#allocation2 + $0x10] sm:$0xff]
        %v576 = vld [vmem:[#allocation2 + $0x18] sm:$0xff]
        %v577 = vld [vmem:[#allocation2 + $0x20] sm:$0xff]
        %v578 = vld [vmem:[#allocation2 + $0x28] sm:$0xff]
        %v579 = vld [vmem:[#allocation2 + $0x30] sm:$0xff]
        %v580 = vld [vmem:[#allocation2 + $0x38] sm:$0xff]
        %v581 = vld [vmem:[#allocation2 + $0x40] sm:$0xf]
        %v582 = vld [vmem:[#allocation2 + $0x48] sm:$0xf]
        %v583 = vld [vmem:[#allocation4] sm:$0xff]
        %v584 = vld [vmem:[%s2] sm:$0xff]
        %586 = vset.pattern.permute.xlu0 0
        %587 = vperm.xlu0 %586, %v584
        %v588 = vpop.permute.xlu0 %587
        %vm590 = vcmask 293888
        %v592 = vsel %vm590, %v583, 0
        %vm594 = vcmask 1043456
        %v596 = vsel %vm594, %v581, 0
        %v599 = vsel %vm594, %v582, 0
        %601 = vmatprep.subr.mxu0 %v574
        %602 = vmatpush1.msra.mxu0 %v573
        %603 = vmatprep.subr.mxu0 %v576
        %604 = vmatpush1.msra.mxu0 %v575
        %605 = vmatprep.subr.mxu0 %v578
        %606 = vmatpush1.msra.mxu0 %v577
        %607 = vmatprep.subr.mxu0 %v580
        %608 = vmatpush1.msra.mxu0 %v579
        %609 = vmatprep.subr.mxu0 %v599
        %610 = vmatpush1.msra.mxu0 %v596
        %611 = vmatprep.subr.mxu0 0.0
        %612 = vmatpush1.msra.mxu0 0.0
        %613 = vmatprep.subr.mxu0 0.0
        %614 = vmatpush1.msra.mxu0 0.0
        %615 = vmatprep.subr.mxu0 0.0
        %616 = vmatpush1.msra.mxu0 0.0
        %617 = vmatprep.subr.mxu0 0.0
        %618 = vmatpush1.msra.mxu0 0.0
        %619 = vmatprep.subr.mxu0 0.0
        %620 = vmatpush1.msra.mxu0 0.0
        %621 = vmatprep.subr.mxu0 0.0
        %622 = vmatpush1.msra.mxu0 0.0
        %623 = vmatprep.subr.mxu0 0.0
        %624 = vmatpush1.msra.mxu0 0.0
        %625 = vmatprep.subr.mxu0 0.0
        %626 = vmatpush1.msra.mxu0 0.0
        %627 = vmatprep.subr.mxu0 0.0
        %628 = vmatpush1.msra.mxu0 0.0
        %629 = vmatprep.subr.mxu0 0.0
        %630 = vmatpush1.msra.mxu0 0.0
        %631 = vmatprep.subr.mxu0 0.0
        %632 = vmatpush1.msra.mxu0 0.0
        %633 = vmatprep.subr.mxu0 0.0
        %634 = vmatpush1.msra.mxu0 0.0
        %635 = vmatprep.subr.mxu0 0.0
        %636 = vmatpush1.msra.mxu0 0.0
        %637 = vmatprep.subr.mxu0 0.0
        %638 = vmatpush1.msra.mxu0 0.0
        %639 = vmatprep.subr.mxu0 0.0
        %640 = vmatpush1.msra.mxu0 0.0
        %641 = vmatprep.subr.mxu0 0.0
        %642 = vmatpush1.msra.mxu0 0.0
        %643 = vmatprep.subr.mxu0 0.0
        %644 = vmatpush1.msra.mxu0 0.0
        %645 = vmatprep.subr.mxu0 0.0
        %646 = vmatpush1.msra.mxu0 0.0
        %647 = vmatprep.subr.mxu0 0.0
        %648 = vmatpush1.msra.mxu0 0.0
        %649 = vmatprep.subr.mxu0 0.0
        %650 = vmatpush1.msra.mxu0 0.0
        %651 = vmatprep.subr.mxu0 0.0
        %652 = vmatpush1.msra.mxu0 0.0
        %653 = vmatprep.subr.mxu0 0.0
        %654 = vmatpush1.msra.mxu0 0.0
        %655 = vmatprep.subr.mxu0 0.0
        %656 = vmatpush1.msra.mxu0 0.0
        %657 = vmatprep.subr.mxu0 0.0
        %658 = vmatpush1.msra.mxu0 0.0
        %659 = vmatprep.subr.mxu0 0.0
        %660 = vmatpush1.msra.mxu0 0.0
        %661 = vmatprep.subr.mxu0 0.0
        %662 = vmatpush1.msra.mxu0 0.0
        %663 = vmatprep.subr.mxu0 0.0
        %664 = vmatpush1.msra.mxu0 0.0
        %665 = vmatprep.mubr.f32.mxu0 0.0
        %666 = vmatmul.mubr.f32.gmra.mrb[0].mxu0 %v592
        %v667 = vpop.f32.mrb[0].mxu0
        %v668 = vadd.f32 %v588, %v667
        %v669 = vpop.f32.mrb[0].mxu0
        %v670 = vadd.f32 %v588, %v669
        %671 = vdwg.mxu0
        %vm672 = vcmp.ge.f32.partialorder %v668, 0.0
        %vm673 = vcmp.ge.f32.partialorder %v670, 0.0
        %v674 = vstv %s384
        %v675 = vmul.f32 %v674, %v668
        %v676 = vmul.f32 %v674, %v670
        %v677 = vsel %vm672, %v668, %v675
        %v678 = vsel %vm673, %v670, %v676
        %679 = vrot.lane.b32.xlu0 %v677, 17
        %v680 = vpop.permute.xlu0 %679
        %681 = vrot.lane.b32.xlu0 %v678, 17
        %v682 = vpop.permute.xlu0 %681
        %v683 = vsel %vm399, %v680, %v682
        %v684 = vsel %vm399, %v682, %v680
        %v685 = vmul.f32 %v684, %v405
        %v686 = vmul.f32 %v683, %v409
        %687 = vst [vmem:[#allocation3] sm:$0xff] %v685
        %688 = vst [vmem:[#allocation3 + $0x8] sm:$0xff] %v686
        %689 = vrot.lane.b32.xlu0 %v677, 16
        %v690 = vpop.permute.xlu0 %689
        %691 = vrot.lane.b32.xlu0 %v678, 16
        %v692 = vpop.permute.xlu0 %691
        %v693 = vsel %vm418, %v690, %v692
        %v694 = vsel %vm418, %v692, %v690
        %v695 = vmul.f32 %v694, %v424
        %v696 = vmul.f32 %v693, %v428
        %697 = vst [vmem:[#allocation3 + $0x10] sm:$0xff] %v695
        %698 = vst [vmem:[#allocation3 + $0x18] sm:$0xff] %v696
        %699 = vrot.lane.b32.xlu0 %v677, 15
        %v700 = vpop.permute.xlu0 %699
        %701 = vrot.lane.b32.xlu0 %v678, 15
        %v702 = vpop.permute.xlu0 %701
        %v703 = vsel %vm443, %v700, %v702
        %v704 = vsel %vm443, %v702, %v700
        %v705 = vmul.f32 %v704, %v449
        %v706 = vmul.f32 %v703, %v453
        %707 = vst [vmem:[#allocation3 + $0x20] sm:$0xff] %v705
        %708 = vst [vmem:[#allocation3 + $0x28] sm:$0xff] %v706
        %709 = vrot.lane.b32.xlu0 %v677, 1
        %v710 = vpop.permute.xlu0 %709
        %711 = vrot.lane.b32.xlu0 %v678, 1
        %v712 = vpop.permute.xlu0 %711
        %v713 = vsel %vm462, %v710, %v712
        %v714 = vsel %vm462, %v712, %v710
        %v715 = vmul.f32 %v714, %v468
        %v716 = vmul.f32 %v713, %v472
        %717 = vst [vmem:[#allocation3 + $0x30] sm:$0xff] %v715
        %718 = vst [vmem:[#allocation3 + $0x38] sm:$0xff] %v716
        %719 = vst [vmem:[#allocation3 + $0x40] sm:$0xff] %v677
        %720 = vst [vmem:[#allocation3 + $0x48] sm:$0xff] %v678
        %721 = vrot.lane.b32.xlu0 %v677, 127
        %v722 = vpop.permute.xlu0 %721
        %723 = vrot.lane.b32.xlu0 %v678, 127
        %v724 = vpop.permute.xlu0 %723
        %v725 = vsel %vm489, %v722, %v724
        %v726 = vsel %vm489, %v724, %v722
        %v727 = vmul.f32 %v725, %v495
        %v728 = vmul.f32 %v726, %v499
        %729 = vst [vmem:[#allocation3 + $0x50] sm:$0xff] %v727
        %730 = vst [vmem:[#allocation3 + $0x58] sm:$0xff] %v728
        %731 = vrot.lane.b32.xlu0 %v677, 113
        %v732 = vpop.permute.xlu0 %731
        %733 = vrot.lane.b32.xlu0 %v678, 113
        %v734 = vpop.permute.xlu0 %733
        %v735 = vsel %vm514, %v732, %v734
        %v736 = vsel %vm514, %v734, %v732
        %v737 = vmul.f32 %v735, %v520
        %v738 = vmul.f32 %v736, %v524
        %739 = vst [vmem:[#allocation3 + $0x60] sm:$0xff] %v737
        %740 = vst [vmem:[#allocation3 + $0x68] sm:$0xff] %v738
        %741 = vrot.lane.b32.xlu0 %v677, 112
        %v742 = vpop.permute.xlu0 %741
        %743 = vrot.lane.b32.xlu0 %v678, 112
        %v744 = vpop.permute.xlu0 %743
        %v745 = vsel %vm533, %v742, %v744
        %v746 = vsel %vm533, %v744, %v742
        %v747 = vmul.f32 %v745, %v539
        %v748 = vmul.f32 %v746, %v543
        %749 = vst [vmem:[#allocation3 + $0x70] sm:$0xff] %v747
        %750 = vst [vmem:[#allocation3 + $0x78] sm:$0xff] %v748
        %751 = vrot.lane.b32.xlu0 %v677, 111
        %v752 = vpop.permute.xlu0 %751
        %753 = vrot.lane.b32.xlu0 %v678, 111
        %v754 = vpop.permute.xlu0 %753
        %v755 = vsel %vm558, %v752, %v754
        %v756 = vsel %vm558, %v754, %v752
        %v757 = vmul.f32 %v755, %v564
        %v758 = vmul.f32 %v756, %v568
        %759 = vst [vmem:[#allocation3 + $0x80] sm:$0xff] %v757
        %760 = vst [vmem:[#allocation3 + $0x88] sm:$0xff] %v758
        %v761 = vld [vmem:[#allocation3] sm:$0xff]
        %v762 = vld [vmem:[#allocation3 + $0x8] sm:$0xff]
        %v763 = vld [vmem:[#allocation3 + $0x10] sm:$0xff]
        %v764 = vld [vmem:[#allocation3 + $0x18] sm:$0xff]
        %v765 = vld [vmem:[#allocation3 + $0x20] sm:$0xff]
        %v766 = vld [vmem:[#allocation3 + $0x28] sm:$0xff]
        %v767 = vld [vmem:[#allocation3 + $0x30] sm:$0xff]
        %v768 = vld [vmem:[#allocation3 + $0x38] sm:$0xff]
        %v769 = vld [vmem:[#allocation3 + $0x40] sm:$0xff]
        %v770 = vld [vmem:[#allocation3 + $0x48] sm:$0xff]
        %v771 = vld [vmem:[#allocation3 + $0x50] sm:$0xff]
        %v772 = vld [vmem:[#allocation3 + $0x58] sm:$0xff]
        %v773 = vld [vmem:[#allocation3 + $0x60] sm:$0xff]
        %v774 = vld [vmem:[#allocation3 + $0x68] sm:$0xff]
        %v775 = vld [vmem:[#allocation3 + $0x70] sm:$0xff]
        %v776 = vld [vmem:[#allocation3 + $0x78] sm:$0xff]
        %v777 = vld [vmem:[#allocation3 + $0x80] sm:$0xff]
        %v778 = vld [vmem:[#allocation3 + $0x88] sm:$0xff]
        %v779 = vld [vmem:[#allocation8] sm:$0xff]
        %v780 = vld [vmem:[%s4] sm:$0xff]
        %782 = vset.pattern.permute.xlu0 0
        %783 = vperm.xlu0 %782, %v780
        %v784 = vpop.permute.xlu0 %783
        %vm786 = vcmask 588800
        %v788 = vsel %vm786, %v779, 0
        %790 = vmatprep.subr.mxu0 %v762
        %791 = vmatpush1.msra.mxu0 %v761
        %792 = vmatprep.subr.mxu0 %v764
        %793 = vmatpush1.msra.mxu0 %v763
        %794 = vmatprep.subr.mxu0 %v766
        %795 = vmatpush1.msra.mxu0 %v765
        %796 = vmatprep.subr.mxu0 %v768
        %797 = vmatpush1.msra.mxu0 %v767
        %798 = vmatprep.subr.mxu0 %v770
        %799 = vmatpush1.msra.mxu0 %v769
        %800 = vmatprep.subr.mxu0 %v772
        %801 = vmatpush1.msra.mxu0 %v771
        %802 = vmatprep.subr.mxu0 %v774
        %803 = vmatpush1.msra.mxu0 %v773
        %804 = vmatprep.subr.mxu0 %v776
        %805 = vmatpush1.msra.mxu0 %v775
        %806 = vmatprep.subr.mxu0 %v778
        %807 = vmatpush1.msra.mxu0 %v777
        %808 = vmatprep.subr.mxu0 0.0
        %809 = vmatpush1.msra.mxu0 0.0
        %810 = vmatprep.subr.mxu0 0.0
        %811 = vmatpush1.msra.mxu0 0.0
        %812 = vmatprep.subr.mxu0 0.0
        %813 = vmatpush1.msra.mxu0 0.0
        %814 = vmatprep.subr.mxu0 0.0
        %815 = vmatpush1.msra.mxu0 0.0
        %816 = vmatprep.subr.mxu0 0.0
        %817 = vmatpush1.msra.mxu0 0.0
        %818 = vmatprep.subr.mxu0 0.0
        %819 = vmatpush1.msra.mxu0 0.0
        %820 = vmatprep.subr.mxu0 0.0
        %821 = vmatpush1.msra.mxu0 0.0
        %822 = vmatprep.subr.mxu0 0.0
        %823 = vmatpush1.msra.mxu0 0.0
        %824 = vmatprep.subr.mxu0 0.0
        %825 = vmatpush1.msra.mxu0 0.0
        %826 = vmatprep.subr.mxu0 0.0
        %827 = vmatpush1.msra.mxu0 0.0
        %828 = vmatprep.subr.mxu0 0.0
        %829 = vmatpush1.msra.mxu0 0.0
        %830 = vmatprep.subr.mxu0 0.0
        %831 = vmatpush1.msra.mxu0 0.0
        %832 = vmatprep.subr.mxu0 0.0
        %833 = vmatpush1.msra.mxu0 0.0
        %834 = vmatprep.subr.mxu0 0.0
        %835 = vmatpush1.msra.mxu0 0.0
        %836 = vmatprep.subr.mxu0 0.0
        %837 = vmatpush1.msra.mxu0 0.0
        %838 = vmatprep.subr.mxu0 0.0
        %839 = vmatpush1.msra.mxu0 0.0
        %840 = vmatprep.subr.mxu0 0.0
        %841 = vmatpush1.msra.mxu0 0.0
        %842 = vmatprep.subr.mxu0 0.0
        %843 = vmatpush1.msra.mxu0 0.0
        %844 = vmatprep.subr.mxu0 0.0
        %845 = vmatpush1.msra.mxu0 0.0
        %846 = vmatprep.subr.mxu0 0.0
        %847 = vmatpush1.msra.mxu0 0.0
        %848 = vmatprep.subr.mxu0 0.0
        %849 = vmatpush1.msra.mxu0 0.0
        %850 = vmatprep.subr.mxu0 0.0
        %851 = vmatpush1.msra.mxu0 0.0
        %852 = vmatprep.subr.mxu0 0.0
        %853 = vmatpush1.msra.mxu0 0.0
        %854 = vmatprep.mubr.f32.mxu0 0.0
        %855 = vmatmul.mubr.f32.gmra.mrb[0].mxu0 %v788
        %v856 = vpop.f32.mrb[0].mxu0
        %v857 = vadd.f32 %v784, %v856
        %v858 = vpop.f32.mrb[0].mxu0
        %v859 = vadd.f32 %v784, %v858
        %860 = vdwg.mxu0
        %vm861 = vcmp.ge.f32.partialorder %v857, 0.0
        %vm862 = vcmp.ge.f32.partialorder %v859, 0.0
        %v863 = vstv %s385
        %v864 = vmul.f32 %v863, %v857
        %v865 = vmul.f32 %v863, %v859
        %v866 = vsel %vm861, %v857, %v864
        %v867 = vsel %vm862, %v859, %v865
        %v868 = vlaneseq
        %v869 = vshrl.u32 %v868, 7
        %v871 = vlaneseq
        %v872 = vshrl.u32 %v871, 7
        %v873 = vsub.s32 0, %v872
        %v874 = vrot.slane %v388, %v873
        %v875 = vlaneseq
        %v876 = vshrl.u32 %v875, 7
        %v877 = vsub.s32 1, %v876
        %v878 = vrot.slane %v388, %v877
        %v881 = vmul.f32 %v866, %v874
        %v882 = vmul.f32 %v867, %v878
        %v883 = vadd.f32 %v881, %v882
        %884 = vadd.xlane.f32.xlu0 %v883
        %v885 = vpop.xlane.xlu0 %884
        %v886 = vmul.f32 %v885, 0.00390625
        %v887 = vrot.slane %v886, 7
        %v888 = vadd.s32 %v869, 4294967295
        %vm889 = vcmp.ge.s32.totalorder %v888, 0
        %vm890 = vcmp.lt.s32.totalorder %v888, 8
        %vm891 = vmand %vm889, %vm890
        %v892 = vsel %vm891, %v887, 0.0
        %s893 = sld [smem:[#allocation10]]
        %v894 = vstv %s893
        %v895 = vmul.f32 %v894, %v892
        %v896 = vadd.f32 %v895, 0.0
        %s897 = sld [smem:[#allocation10 + $0x1]]
        %v898 = vstv %s897
        %v899 = vmul.f32 %v898, %v886
        %v900 = vadd.f32 %v896, %v899
        %v901 = vrot.slane %v886, 1
        %v902 = vadd.s32 %v869, 1
        %vm903 = vcmp.ge.s32.totalorder %v902, 0
        %vm904 = vcmp.lt.s32.totalorder %v902, 8
        %vm905 = vmand %vm903, %vm904
        %v906 = vsel %vm905, %v901, 0.0
        %s907 = sld [smem:[#allocation10 + $0x2]]
        %v908 = vstv %s907
        %v909 = vmul.f32 %v908, %v906
        %v910 = vadd.f32 %v900, %v909
        %v911 = vxor.u32 %v910, 2147483648
        %v912 = vmul.f32 %v911, 1.442695
        %v913 = vpow.pop %v912
        %v914 = vadd.f32 %v913, 1.0
        %v915 = vrcp.pop %v914
        %v916 = vmul.f32 1.0, %v915
        %918 = vset.pattern.permute.xlu0 0
        %919 = vperm.xlu0 %918, %v916
        %v920 = vpop.permute.xlu0 %919
        %v922 = vmul.f32 %v920, %v874
        %v923 = vmul.f32 %v920, %v878
        %v924 = vmul.f32 %v866, %v922
        %v925 = vmul.f32 %v867, %v923
        %926 = vst [vmem:[%s378] sm:$0xff] %v924
        %927 = vst [vmem:[%s378 + $0x8] sm:$0xff] %v925
        %s928 = sand.u32 %s229, 1
        %s929 = scalar_lea.sflag [#allocation6], %s928
        %s930 = sand.u32 %s229, 1
        %s931 = smul.addr %s930, 16
        %s932 = scalar_lea.vmem [#allocation13], %s931
        // Predicated region
        $region73: #{tpu_custom_call.1} parent=55 // pred_check
          %p933 = pneg %p239
        $region74: #{tpu_custom_call.1} parent=55 // pred_check_branch
          %935 = sbr.rel (%p933) target = $region76
        $region75: #{tpu_custom_call.1} parent=55 // pred_region
          %s937 = ssub.s32 256, 256
          %938 = vsyncadd %s929, %s937
          %s939 = smul.addr %s27, 2
          %s940 = smul.addr %s939, 128
          %s941 = scalar_lea.hbm %s9, %s940
          %s943 = sshll.u32 %s932, 4
          %s944 = int_to_ptr.vmem [resolvable:$true] %s943
          %946 = dma.vmem_to_hbm [thread:$0]  %s944, 256, %s941, %s929
        $region76: #{tpu_custom_call.1} parent=55 // pred_fallthru
          _
      $region56: #{tpu_custom_call.1} parent=5 // pred_fallthru
        _
      %p947 = scmp.le.s32.totalorder 2, %s22
      // Predicated region
      $region77: #{tpu_custom_call.1} parent=5 // pred_check
        %p948 = pneg %p947
      $region78: #{tpu_custom_call.1} parent=5 // pred_check_branch
        %950 = sbr.rel (%p948) target = $region80
      $region79: #{tpu_custom_call.1} parent=5 // pred_region
        %s951 = ssub.s32 %s22, 2
        // Predicated region
        $region81: #{tpu_custom_call.1} parent=79 // pred_check
          %p952 = pneg %p245
        $region82: #{tpu_custom_call.1} parent=79 // pred_check_branch
          %954 = sbr.rel (%p952) target = $region84
        $region83: #{tpu_custom_call.1} parent=79 // pred_region
          %s955 = sand.u32 %s230, 1
          %s956 = scalar_lea.sflag [#allocation6], %s955
          %s957 = sand.u32 %s230, 1
          %s958 = smul.addr %s957, 16
          %s959 = scalar_lea.vmem [#allocation13], %s958
          %960 = dma.done %s956, 256
        $region84: #{tpu_custom_call.1} parent=79 // pred_fallthru
          _
      $region80: #{tpu_custom_call.1} parent=5 // pred_fallthru
        _
    $region6: #{tpu_custom_call.1} parent=1 // loop_footer
      %s26 = sadd.s32 1, %s22
    $region7: #{tpu_custom_call.1} parent=1 // loop_footer_branch
      %21 = sbr.rel target = $region3
    $region8: #{tpu_custom_call.1} parent=1 // loop_exit
      _
    %961 = vsyncpa [#allocation5], 1
    %s962 = scalar_lea.sflag [#allocation5], 1
    %963 = vsyncpa %s962, 1
    %964 = vsyncpa [#allocation9], 1
    %965 = vsyncpa [#allocation6], 1
    %s966 = scalar_lea.sflag [#allocation6], 1
    %967 = vsyncpa %s966, 1
    %968 = vsyncpa [#allocation7], 1
    %s969 = scalar_lea.sflag [#allocation7], 1
    %970 = vsyncpa %s969, 1
    %971 = vsyncpa [#allocation12], 1

</llo_original>
